<compile_context>
chip_gen: v7x
topology: tpu7x:2x2x1
jax: 0.10.0
libtpu: 0.0.40
codegen_flags: <defaults>
</compile_context>

<pallas_src>
import functools

import jax
import jax.numpy as jnp
from jax.experimental import pallas as pl
from jax.experimental.pallas import tpu as pltpu

LN_EPS = 1e-6
GRN_EPS = 1e-6

# Abramowitz & Stegun 7.1.26 rational approximation of erf (|err| ~1.5e-7,
# i.e. f32-noise level vs. the exact-erf GELU used by torch.nn.functional.gelu).
_ERF_A = (0.254829592, -0.284496736, 1.421413741, -1.453152027, 1.061405429)
_ERF_P = 0.3275911
_INV_SQRT2 = 0.7071067811865476


def _erf_from_t(t, ax, sgn):
    a1, a2, a3, a4, a5 = _ERF_A
    poly = ((((a5 * t + a4) * t + a3) * t + a2) * t + a1) * t
    return sgn * (1.0 - poly * jnp.exp(-ax * ax))


def _gelu_kernel(x):
    # In-kernel exact-erf GELU; the 1/(1+p|x|) divide goes to the EUP slot.
    z = x * _INV_SQRT2
    sgn = jnp.where(z < 0.0, -1.0, 1.0)
    ax = jnp.abs(z)
    t = pl.reciprocal(1.0 + _ERF_P * ax, approx=True)
    return 0.5 * x * (1.0 + _erf_from_t(t, ax, sgn))


def _gelu_ref(x):
    # Reference version (outside Pallas): same polynomial, exact division.
    z = x * _INV_SQRT2
    sgn = jnp.where(z < 0.0, -1.0, 1.0)
    ax = jnp.abs(z)
    t = 1.0 / (1.0 + _ERF_P * ax)
    return 0.5 * x * (1.0 + _erf_from_t(t, ax, sgn))


def convnext_kernel(x_ref, w_in_ref, cvec_ref, w_dw_ref, pvec_ref,
                    w1_ref, w2_ref, w_out_ref,
                    o_ref,
                    h_ref,
                    *, num_layers, kernel_size, bblk, t_len):
    """Grid = (batch_blocks, num_layers); the layer axis is sequential ('arbitrary').

    h_ref : (bblk*T, C) f32 scratch -- residual stream carried across layer steps.
    Everything else (depthwise conv, FFN activations) lives in values/vregs.
    """
    # TODO(synk): causal=True (ReflectionPad1d((0, k-1))) and glu=True branches
    # are not implemented; defaults (causal=False, glu=False) only.
    # TODO(synk): on v6e/v7x the GELU/GRN/depthwise elementwise math could run in
    # bf16 (f32 reductions) for ~2x VPU throughput; kept in f32 here so a single
    # code path stays exact-erf-accurate and does not regress on v5e (no bf16 VPU).
    l = pl.program_id(1)
    pad = kernel_size // 2
    m_rows = bblk * t_len
    C = h_ref.shape[1]
    F = w1_ref.shape[1]
    c_out_p = w_out_ref.shape[1]

    # ---- in_conv (1x1): only on the first layer step of each batch block ----
    @pl.when(l == 0)
    def _():
        b_in = cvec_ref[:, 0:C]
        h_ref[...] = (jnp.dot(x_ref[...], w_in_ref[...],
                              preferred_element_type=jnp.float32) + b_in)

    # ---- per-layer packed small tensors: one DMA instead of five ------------
    pv = pvec_ref[...]                                # (1, 2C + 3F) f32
    b_dw = pv[:, 0:C]
    b2 = pv[:, C:2 * C]
    b1 = pv[:, 2 * C:2 * C + F]
    grn_g = pv[:, 2 * C + F:2 * C + 2 * F]
    grn_b = pv[:, 2 * C + 2 * F:2 * C + 3 * F]
    w_dw = w_dw_ref[...]                              # (K, C) f32

    h2 = h_ref[...]                                   # (M, C) f32 residual input

    # Depthwise conv: interior rows via K sublane rotations (XLU) of the flat
    # (M, C) buffer.  The roll only wraps (across sequences / the buffer) for
    # rows within `pad` of a sequence boundary; those rows are recomputed
    # exactly with reflection padding and merged with a single concatenate --
    # no VMEM scratch round-trip, no masked per-row stores.
    acc = h2 * w_dw[pad:pad + 1, :]
    for j in range(kernel_size):
        if j == pad:
            continue
        acc = acc + pltpu.roll(h2, shift=(pad - j) % m_rows, axis=0) * w_dw[j:j + 1, :]
    dw3 = (acc + b_dw).reshape(bblk, t_len, C)

    if pad > 0:
        h3 = h2.reshape(bblk, t_len, C)

        def boundary_row(t):
            row = None
            for j in range(kernel_size):
                idx = t + j - pad
                if idx < 0:
                    idx = -idx                        # left reflection
                elif idx >= t_len:
                    idx = 2 * (t_len - 1) - idx       # right reflection
                term = h3[:, idx, :] * w_dw[j:j + 1, :]
                row = term if row is None else row + term
            return (row + b_dw)[:, None, :]           # (bblk, 1, C)

        pieces = ([boundary_row(t) for t in range(pad)]
                  + [dw3[:, pad:t_len - pad, :]]
                  + [boundary_row(t) for t in range(t_len - pad, t_len)])
        dw3 = jnp.concatenate(pieces, axis=1)

    # FFN: 1x1 -> exact-erf GELU -> GRN -> 1x1, then residual add.
    dwv = dw3.reshape(m_rows, C).astype(jnp.bfloat16)
    y = jnp.dot(dwv, w1_ref[...], preferred_element_type=jnp.float32) + b1
    y = _gelu_kernel(y)                               # (M, F) f32

    # GlobalResponseNorm1d: L2 over time per sequence, normalized by channel mean.
    y3 = y.reshape(bblk, t_len, F)
    gx = jnp.sqrt(jnp.sum(y3 * y3, axis=1, keepdims=True))          # (bblk,1,F)
    # Exact division for the denominator: it is only (bblk,1,1) wide so the
    # approximate-reciprocal EUP saving is nil; exact here is free accuracy.
    nx = gx / (jnp.mean(gx, axis=2, keepdims=True) + GRN_EPS)
    y3 = grn_g.reshape(1, 1, F) * (y3 * nx) + grn_b.reshape(1, 1, F) + y3

    y2 = y3.reshape(m_rows, F).astype(jnp.bfloat16)
    ffn = jnp.dot(y2, w2_ref[...], preferred_element_type=jnp.float32) + b2
    h_new = h2 + ffn

    # Carry the residual stream to the next layer step (store skipped on the last).
    @pl.when(l < num_layers - 1)
    def _():
        h_ref[...] = h_new

    # ---- post LayerNorm (channels) + out_conv: only on the last layer step ----
    @pl.when(l == num_layers - 1)
    def _():
        ln_g = cvec_ref[:, C:2 * C]
        ln_b = cvec_ref[:, 2 * C:3 * C]
        b_out = cvec_ref[:, 3 * C:3 * C + c_out_p]
        mu = jnp.mean(h_new, axis=1, keepdims=True)
        xc = h_new - mu
        var = jnp.mean(xc * xc, axis=1, keepdims=True)
        hn = xc * jax.lax.rsqrt(var + LN_EPS) * ln_g + ln_b
        out = (jnp.dot(hn.astype(jnp.bfloat16), w_out_ref[...],
                       preferred_element_type=jnp.float32) + b_out)
        o_ref[...] = out.astype(o_ref.dtype)


def _vmem_limit_bytes():
    """Per-TensorCore VMEM budget: ~87% of physical, capped at 112 MiB.
    v5e/v6e (128 MiB) -> 112 MiB; v7x (64 MiB) / unknown -> 56 MiB."""
    try:
        cap = int(pltpu.get_tpu_info().vmem_capacity_bytes)
    except Exception:
        cap = 64 * 1024 * 1024          # assume the smallest generation (v7x)
    return min(cap * 7 // 8, 112 * 1024 * 1024)


def _pick_batch_block(batch, t_len, *, bytes_per_row, fixed_bytes, vmem_budget,
                      target_rows=768, min_blocks=2):
    """Largest divisor of `batch` whose (bblk*T)-row working set fits the VMEM
    budget, stopping once `target_rows` stacked rows are reached (fills the MXU
    M dimension / hides per-layer weight DMA).  When possible keep at least
    `min_blocks` batch blocks so the 'parallel' grid axis can span both
    TensorCores on a v7x chip."""
    divisors = [d for d in range(1, batch + 1) if batch % d == 0]
    cands = [d for d in divisors if batch // d >= min_blocks] or divisors
    best = cands[0]
    for d in cands:
        if fixed_bytes + d * t_len * bytes_per_row > vmem_budget:
            break
        best = d
        if d * t_len >= target_rows:
            break
    return best


def convnext_stack_forward(x_ncl, params, *, batch_block=None, target_rows=768):
    """x_ncl: (B, C_in, T) float32 (PyTorch NCL layout).  Returns (B, C_out, T) f32."""
    B, C_in, T = x_ncl.shape
    C = params['w_in'].shape[1]
    C_out = params['w_out'].shape[1]
    L, K, _ = params['w_dw'].shape
    F = params['w1'].shape[2]

    assert K % 2 == 1, "symmetric reflection padding assumes an odd kernel_size"
    assert T >= K, "sequence too short for reflection padding"
    assert T % 8 == 0, "T must be a multiple of 8 (sublane tiling)"
    # TODO(synk): tile the time axis (depthwise halo + two-pass GRN) for very
    # long T; here the full (bblk*T, F) intermediate stays resident in VMEM.

    # Lane-dense output: pad C_out to a multiple of 128 inside the kernel and
    # emit bf16 (halves HBM writeback); slice padding off / cast back outside.
    c_out_p = max(128, ((C_out + 127) // 128) * 128)

    vmem_budget = _vmem_limit_bytes()
    # Rough per-step VMEM model, used only to cap the batch block:
    #   row-proportional: h scratch + depthwise values (f32, ~C each), live FFN
    #   activations (~2F f32), double-buffered bf16 x and output blocks;
    bytes_per_row = 4 * C + 4 * C + 8 * F + 2 * 2 * C_in + 2 * 2 * c_out_p
    #   fixed: double-buffered per-layer weights + constant blocks + slack.
    fixed_bytes = (2 * (2 * C * F * 2 + K * C * 4 + (2 * C + 3 * F) * 4)
                   + 2 * (C_in * C * 2 + C * c_out_p * 2 + (3 * C + c_out_p) * 4)
                   + (2 << 20))

    if batch_block is None:
        bblk = _pick_batch_block(B, T, bytes_per_row=bytes_per_row,
                                 fixed_bytes=fixed_bytes, vmem_budget=vmem_budget,
                                 target_rows=target_rows)
    else:
        bblk = batch_block
    assert B % bblk == 0
    n_bblk = B // bblk
    m_blk = bblk * T

    # bf16 matmul operands (f32 accumulation in-kernel); x is only ever used as
    # a matmul operand, so it ships to the kernel in bf16 (halves its DMA).
    x2 = jnp.transpose(x_ncl, (0, 2, 1)).reshape(B * T, C_in).astype(jnp.bfloat16)
    w_in = params['w_in'].astype(jnp.bfloat16)
    w1 = params['w1'].astype(jnp.bfloat16)
    w2 = params['w2'].astype(jnp.bfloat16)
    w_out = jnp.pad(params['w_out'],
                    ((0, 0), (0, c_out_p - C_out))).astype(jnp.bfloat16)
    b_out = jnp.pad(params['b_out'],
                    ((0, 0), (0, c_out_p - C_out))).astype(jnp.float32)

    # Pack the constant small tensors into one row and the per-layer small
    # tensors into one (L, 1, 2C+3F) array: 1-2 DMAs per grid step instead of ~8.
    cvec = jnp.concatenate([params['b_in'], params['ln_g'], params['ln_b'], b_out],
                           axis=-1).astype(jnp.float32)          # (1, 3C + c_out_p)
    pvec = jnp.concatenate([params['b_dw'], params['b2'], params['b1'],
                            params['grn_g'], params['grn_b']],
                           axis=-1).astype(jnp.float32)          # (L, 1, 2C + 3F)
    w_dw = params['w_dw'].astype(jnp.float32)

    kernel = functools.partial(convnext_kernel, num_layers=L, kernel_size=K,
                               bblk=bblk, t_len=T)

    # Constant-index blocks are fetched once and not re-DMA'd on later grid
    # steps; l-indexed per-layer weights are double-buffered so layer l+1
    # prefetches behind layer l compute.
    # TODO(synk): pipeline_mode=pl.Buffered(1) on the constant-index specs would
    # halve their VMEM footprint; left at the default for lowering compatibility.
    out = pl.pallas_call(
        kernel,
        out_shape=jax.ShapeDtypeStruct((B * T, c_out_p), jnp.bfloat16),
        grid=(n_bblk, L),
        in_specs=[
            pl.BlockSpec((m_blk, C_in),            lambda bb, l: (bb, 0)),    # x (bf16)
            pl.BlockSpec((C_in, C),                lambda bb, l: (0, 0)),     # w_in (bf16)
            pl.BlockSpec((1, 3 * C + c_out_p),     lambda bb, l: (0, 0)),     # cvec (f32)
            pl.BlockSpec((None, K, C),             lambda bb, l: (l, 0, 0)),  # w_dw[l]
            pl.BlockSpec((None, 1, 2 * C + 3 * F), lambda bb, l: (l, 0, 0)),  # pvec[l]
            pl.BlockSpec((None, C, F),             lambda bb, l: (l, 0, 0)),  # w1[l] (bf16)
            pl.BlockSpec((None, F, C),             lambda bb, l: (l, 0, 0)),  # w2[l] (bf16)
            pl.BlockSpec((C, c_out_p),             lambda bb, l: (0, 0)),     # w_out (bf16)
        ],
        out_specs=pl.BlockSpec((m_blk, c_out_p), lambda bb, l: (bb, 0)),
        scratch_shapes=[pltpu.VMEM((m_blk, C), jnp.float32)],      # residual stream h
        compiler_params=pltpu.CompilerParams(
            dimension_semantics=("parallel", "arbitrary"),
            vmem_limit_bytes=vmem_budget),
    )(x2, w_in, cvec, w_dw, pvec, w1, w2, w_out)

    out = out.reshape(B, T, c_out_p)[:, :, :C_out].astype(jnp.float32)
    return jnp.transpose(out, (0, 2, 1))                           # back to NCL


def reference_forward(x_btc, p, *, kernel_size):
    """Pure-JAX reference (channels-last).  Matmul operands cast to bf16 with f32
    accumulation (mirroring the kernel); elementwise math in f32."""
    pad = kernel_size // 2

    def mm(a, w):
        return jnp.einsum('...i,ij->...j', a.astype(jnp.bfloat16),
                          w.astype(jnp.bfloat16),
                          preferred_element_type=jnp.float32)

    h = mm(x_btc, p['w_in']) + p['b_in']
    T = h.shape[1]
    L = p['w_dw'].shape[0]
    for l in range(L):
        res = h
        left = jnp.flip(h[:, 1:pad + 1, :], axis=1)
        right = jnp.flip(h[:, T - 1 - pad:T - 1, :], axis=1)
        padded = jnp.concatenate([left, h, right], axis=1)
        w_dw = p['w_dw'][l]                                           # (K, C)
        dw = sum(padded[:, j:j + T, :] * w_dw[j][None, None, :]
                 for j in range(kernel_size)) + p['b_dw'][l]
        y = mm(dw, p['w1'][l]) + p['b1'][l]
        y = _gelu_ref(y)
        gx = jnp.sqrt(jnp.sum(y * y, axis=1, keepdims=True))
        nx = gx / (jnp.mean(gx, axis=2, keepdims=True) + GRN_EPS)
        y = p['grn_g'][l] * (y * nx) + p['grn_b'][l] + y
        y = mm(y, p['w2'][l]) + p['b2'][l]
        h = res + y
    mu = jnp.mean(h, axis=-1, keepdims=True)
    var = jnp.mean((h - mu) ** 2, axis=-1, keepdims=True)
    h = (h - mu) / jnp.sqrt(var + LN_EPS) * p['ln_g'] + p['ln_b']
    return mm(h, p['w_out']) + p['b_out']


if __name__ == "__main__":
    # Small shapes consistent with the module: in=8, inter=32, ffn=64, out=8,
    # 2 layers, kernel_size=7, T=16, batch=2.
    B, C_in, C, F, C_out, T, L, K = 2, 8, 32, 64, 8, 16, 2, 7

    key = jax.random.PRNGKey(0)
    keys = jax.random.split(key, 16)

    def nrm(k, shape, scale=0.1):
        return jax.random.normal(k, shape, dtype=jnp.float32) * scale

    # Deterministic synthetic parameters (kernel-friendly, pre-transposed layouts).
    params = {
        'w_in':  nrm(keys[0], (C_in, C)),       # Conv1d(in, inter, 1).weight[:, :, 0].T
        'b_in':  nrm(keys[1], (1, C)),
        'w_dw':  nrm(keys[2], (L, K, C)),       # depthwise Conv1d weight (C, 1, K) -> (K, C) per layer
        'b_dw':  nrm(keys[3], (L, 1, C)),
        'w1':    nrm(keys[4], (L, C, F)),       # ffn c1 weight transposed
        'b1':    nrm(keys[5], (L, 1, F)),
        'grn_g': nrm(keys[6], (L, 1, F)),       # (zeros in PyTorch init; random here to exercise GRN)
        'grn_b': nrm(keys[7], (L, 1, F)),
        'w2':    nrm(keys[8], (L, F, C)),       # ffn c2 weight transposed
        'b2':    nrm(keys[9], (L, 1, C)),
        'ln_g':  1.0 + nrm(keys[10], (1, C)),
        'ln_b':  nrm(keys[11], (1, C)),
        'w_out': nrm(keys[12], (C, C_out)),
        'b_out': nrm(keys[13], (1, C_out)),
    }

    x = jax.random.normal(keys[14], (B, C_in, T), dtype=jnp.float32)  # NCL, like PyTorch

    out = convnext_stack_forward(x, params)
    out = jax.block_until_ready(out)
    assert out.shape == (B, C_out, T)

    ref = reference_forward(jnp.transpose(x, (0, 2, 1)), params, kernel_size=K)
    ref = jnp.transpose(ref, (0, 2, 1))
    err = float(jnp.max(jnp.abs(out - ref)))
    # Tolerance budget: bf16 matmul operands (shared with the reference, mostly
    # cancelled), the EUP approximate reciprocal inside the GELU, and the bf16
    # quantization of the kernel's final output block (~few e-3 combined).
    assert err < 2e-2, f"max abs err {err}"

    print("KERNEL_OK")
</pallas_src>

<mosaic_0001>
module attributes {stable_mosaic.version = 11 : i64} {
  func.func @convnext_kernel(%arg0: i32, %arg1: i32, %arg2: memref<16x8xbf16, #tpu.memory_space<vmem>>, %arg3: memref<8x32xbf16, #tpu.memory_space<vmem>>, %arg4: memref<1x224xf32, #tpu.memory_space<vmem>>, %arg5: memref<1x7x32xf32, #tpu.memory_space<vmem>>, %arg6: memref<1x1x256xf32, #tpu.memory_space<vmem>>, %arg7: memref<1x32x64xbf16, #tpu.memory_space<vmem>>, %arg8: memref<1x64x32xbf16, #tpu.memory_space<vmem>>, %arg9: memref<32x128xbf16, #tpu.memory_space<vmem>>, %arg10: memref<16x128xbf16, #tpu.memory_space<vmem>>, %arg11: memref<16x32xf32, #tpu.memory_space<vmem>>) attributes {dimension_semantics = [#tpu.dimension_semantics<parallel>, #tpu.dimension_semantics<arbitrary>], iteration_bounds = array<i64: 2, 2>, scalar_prefetch = 0 : i64, scratch_operands = 1 : i64, tpu.core_type = #tpu.core_type<tc>, window_params = [{transform_indices = @transform_0, window_bounds = array<i64: 16, 8>}, {pipeline_mode = #tpu.pipeline_mode<synchronous>, transform_indices = @transform_1, window_bounds = array<i64: 8, 32>}, {pipeline_mode = #tpu.pipeline_mode<synchronous>, transform_indices = @transform_2, window_bounds = array<i64: 1, 224>}, {transform_indices = @transform_3, window_bounds = array<i64: 1, 7, 32>}, {transform_indices = @transform_4, window_bounds = array<i64: 1, 1, 256>}, {transform_indices = @transform_5, window_bounds = array<i64: 1, 32, 64>}, {transform_indices = @transform_6, window_bounds = array<i64: 1, 64, 32>}, {pipeline_mode = #tpu.pipeline_mode<synchronous>, transform_indices = @transform_7, window_bounds = array<i64: 32, 128>}, {transform_indices = @transform_8, window_bounds = array<i64: 16, 128>}]} {
    %c0_i32 = arith.constant 0 : i32
    %0 = arith.cmpi eq, %arg1, %c0_i32 : i32
    %1 = arith.extui %0 : i1 to i32
    %c0_i32_0 = arith.constant 0 : i32
    %2 = arith.cmpi ne, %1, %c0_i32_0 : i32
    scf.if %2 {
      %c0_38 = arith.constant 0 : index
      %c0_39 = arith.constant 0 : index
      %351 = vector.load %arg4[%c0_38, %c0_39] : memref<1x224xf32, #tpu.memory_space<vmem>>, vector<1x32xf32>
      %c0_40 = arith.constant 0 : index
      %c0_41 = arith.constant 0 : index
      %352 = vector.load %arg2[%c0_40, %c0_41] : memref<16x8xbf16, #tpu.memory_space<vmem>>, vector<16x8xbf16>
      %c0_42 = arith.constant 0 : index
      %c0_43 = arith.constant 0 : index
      %353 = vector.load %arg3[%c0_42, %c0_43] : memref<8x32xbf16, #tpu.memory_space<vmem>>, vector<8x32xbf16>
      %cst_44 = arith.constant dense<0.000000e+00> : vector<16x32xf32>
      %354 = tpu.matmul %352, %353, %cst_44 {dimension_numbers = #tpu.dot_dimension_numbers<[1], [0], [0], [1], [0, 0, 1, 1], [], []>} : vector<16x8xbf16>, vector<8x32xbf16>, vector<16x32xf32> -> vector<16x32xf32>
      %355 = vector.broadcast %351 : vector<1x32xf32> to vector<16x32xf32>
      %356 = arith.addf %354, %355 : vector<16x32xf32>
      %c0_45 = arith.constant 0 : index
      %c0_46 = arith.constant 0 : index
      %357 = vector.load %arg11[%c0_45, %c0_46] : memref<16x32xf32, #tpu.memory_space<vmem>>, vector<16x32xf32>
      tpu.vector_store %arg11[%c0_45, %c0_46], %356 {strides = array<i32>} : memref<16x32xf32, #tpu.memory_space<vmem>>, vector<16x32xf32>,
    } else {
    }
    %c0 = arith.constant 0 : index
    %c0_1 = arith.constant 0 : index
    %c0_2 = arith.constant 0 : index
    %3 = vector.load %arg6[%c0, %c0_1, %c0_2] : memref<1x1x256xf32, #tpu.memory_space<vmem>>, vector<1x1x256xf32>
    %4 = vector.shape_cast %3 : vector<1x1x256xf32> to vector<1x256xf32>
    %5 = vector.extract_strided_slice %4 {offsets = [0, 0], sizes = [1, 32], strides = [1, 1]} : vector<1x256xf32> to vector<1x32xf32>
    %6 = vector.extract_strided_slice %4 {offsets = [0, 32], sizes = [1, 32], strides = [1, 1]} : vector<1x256xf32> to vector<1x32xf32>
    %7 = vector.extract_strided_slice %4 {offsets = [0, 64], sizes = [1, 64], strides = [1, 1]} : vector<1x256xf32> to vector<1x64xf32>
    %8 = vector.extract_strided_slice %4 {offsets = [0, 128], sizes = [1, 64], strides = [1, 1]} : vector<1x256xf32> to vector<1x64xf32>
    %9 = vector.extract_strided_slice %4 {offsets = [0, 192], sizes = [1, 64], strides = [1, 1]} : vector<1x256xf32> to vector<1x64xf32>
    %c0_3 = arith.constant 0 : index
    %c0_4 = arith.constant 0 : index
    %c0_5 = arith.constant 0 : index
    %10 = vector.load %arg5[%c0_3, %c0_4, %c0_5] : memref<1x7x32xf32, #tpu.memory_space<vmem>>, vector<1x7x32xf32>
    %11 = vector.shape_cast %10 : vector<1x7x32xf32> to vector<7x32xf32>
    %c0_6 = arith.constant 0 : index
    %c0_7 = arith.constant 0 : index
    %12 = vector.load %arg11[%c0_6, %c0_7] : memref<16x32xf32, #tpu.memory_space<vmem>>, vector<16x32xf32>
    %13 = vector.extract_strided_slice %11 {offsets = [3, 0], sizes = [1, 32], strides = [1, 1]} : vector<7x32xf32> to vector<1x32xf32>
    %14 = vector.broadcast %13 : vector<1x32xf32> to vector<16x32xf32>
    %15 = arith.mulf %12, %14 : vector<16x32xf32>
    %c3_i32 = arith.constant 3 : i32
    %16 = tpu.dynamic_rotate %12 by %c3_i32 dim 0 : vector<16x32xf32>, i32 -> vector<16x32xf32>
    %17 = vector.extract_strided_slice %11 {offsets = [0, 0], sizes = [1, 32], strides = [1, 1]} : vector<7x32xf32> to vector<1x32xf32>
    %18 = vector.broadcast %17 : vector<1x32xf32> to vector<16x32xf32>
    %19 = arith.mulf %16, %18 : vector<16x32xf32>
    %20 = arith.addf %15, %19 : vector<16x32xf32>
    %c2_i32 = arith.constant 2 : i32
    %21 = tpu.dynamic_rotate %12 by %c2_i32 dim 0 : vector<16x32xf32>, i32 -> vector<16x32xf32>
    %22 = vector.extract_strided_slice %11 {offsets = [1, 0], sizes = [1, 32], strides = [1, 1]} : vector<7x32xf32> to vector<1x32xf32>
    %23 = vector.broadcast %22 : vector<1x32xf32> to vector<16x32xf32>
    %24 = arith.mulf %21, %23 : vector<16x32xf32>
    %25 = arith.addf %20, %24 : vector<16x32xf32>
    %c1_i32 = arith.constant 1 : i32
    %26 = tpu.dynamic_rotate %12 by %c1_i32 dim 0 : vector<16x32xf32>, i32 -> vector<16x32xf32>
    %27 = vector.extract_strided_slice %11 {offsets = [2, 0], sizes = [1, 32], strides = [1, 1]} : vector<7x32xf32> to vector<1x32xf32>
    %28 = vector.broadcast %27 : vector<1x32xf32> to vector<16x32xf32>
    %29 = arith.mulf %26, %28 : vector<16x32xf32>
    %30 = arith.addf %25, %29 : vector<16x32xf32>
    %c15_i32 = arith.constant 15 : i32
    %31 = tpu.dynamic_rotate %12 by %c15_i32 dim 0 : vector<16x32xf32>, i32 -> vector<16x32xf32>
    %32 = vector.extract_strided_slice %11 {offsets = [4, 0], sizes = [1, 32], strides = [1, 1]} : vector<7x32xf32> to vector<1x32xf32>
    %33 = vector.broadcast %32 : vector<1x32xf32> to vector<16x32xf32>
    %34 = arith.mulf %31, %33 : vector<16x32xf32>
    %35 = arith.addf %30, %34 : vector<16x32xf32>
    %c14_i32 = arith.constant 14 : i32
    %36 = tpu.dynamic_rotate %12 by %c14_i32 dim 0 : vector<16x32xf32>, i32 -> vector<16x32xf32>
    %37 = vector.extract_strided_slice %11 {offsets = [5, 0], sizes = [1, 32], strides = [1, 1]} : vector<7x32xf32> to vector<1x32xf32>
    %38 = vector.broadcast %37 : vector<1x32xf32> to vector<16x32xf32>
    %39 = arith.mulf %36, %38 : vector<16x32xf32>
    %40 = arith.addf %35, %39 : vector<16x32xf32>
    %c13_i32 = arith.constant 13 : i32
    %41 = tpu.dynamic_rotate %12 by %c13_i32 dim 0 : vector<16x32xf32>, i32 -> vector<16x32xf32>
    %42 = vector.extract_strided_slice %11 {offsets = [6, 0], sizes = [1, 32], strides = [1, 1]} : vector<7x32xf32> to vector<1x32xf32>
    %43 = vector.broadcast %42 : vector<1x32xf32> to vector<16x32xf32>
    %44 = arith.mulf %41, %43 : vector<16x32xf32>
    %45 = arith.addf %40, %44 : vector<16x32xf32>
    %46 = vector.broadcast %5 : vector<1x32xf32> to vector<16x32xf32>
    %47 = arith.addf %45, %46 : vector<16x32xf32>
    %48 = vector.shape_cast %47 : vector<16x32xf32> to vector<1x16x32xf32>
    %49 = vector.shape_cast %12 : vector<16x32xf32> to vector<1x16x32xf32>
    %50 = vector.extract_strided_slice %49 {offsets = [0, 3, 0], sizes = [1, 1, 32], strides = [1, 1, 1]} : vector<1x16x32xf32> to vector<1x1x32xf32>
    %51 = vector.shape_cast %50 : vector<1x1x32xf32> to vector<1x32xf32>
    %52 = vector.extract_strided_slice %11 {offsets = [0, 0], sizes = [1, 32], strides = [1, 1]} : vector<7x32xf32> to vector<1x32xf32>
    %53 = arith.mulf %51, %52 : vector<1x32xf32>
    %54 = vector.extract_strided_slice %49 {offsets = [0, 2, 0], sizes = [1, 1, 32], strides = [1, 1, 1]} : vector<1x16x32xf32> to vector<1x1x32xf32>
    %55 = vector.shape_cast %54 : vector<1x1x32xf32> to vector<1x32xf32>
    %56 = vector.extract_strided_slice %11 {offsets = [1, 0], sizes = [1, 32], strides = [1, 1]} : vector<7x32xf32> to vector<1x32xf32>
    %57 = arith.mulf %55, %56 : vector<1x32xf32>
    %58 = arith.addf %53, %57 : vector<1x32xf32>
    %59 = vector.extract_strided_slice %49 {offsets = [0, 1, 0], sizes = [1, 1, 32], strides = [1, 1, 1]} : vector<1x16x32xf32> to vector<1x1x32xf32>
    %60 = vector.shape_cast %59 : vector<1x1x32xf32> to vector<1x32xf32>
    %61 = vector.extract_strided_slice %11 {offsets = [2, 0], sizes = [1, 32], strides = [1, 1]} : vector<7x32xf32> to vector<1x32xf32>
    %62 = arith.mulf %60, %61 : vector<1x32xf32>
    %63 = arith.addf %58, %62 : vector<1x32xf32>
    %64 = vector.extract_strided_slice %49 {offsets = [0, 0, 0], sizes = [1, 1, 32], strides = [1, 1, 1]} : vector<1x16x32xf32> to vector<1x1x32xf32>
    %65 = vector.shape_cast %64 : vector<1x1x32xf32> to vector<1x32xf32>
    %66 = vector.extract_strided_slice %11 {offsets = [3, 0], sizes = [1, 32], strides = [1, 1]} : vector<7x32xf32> to vector<1x32xf32>
    %67 = arith.mulf %65, %66 : vector<1x32xf32>
    %68 = arith.addf %63, %67 : vector<1x32xf32>
    %69 = vector.extract_strided_slice %49 {offsets = [0, 1, 0], sizes = [1, 1, 32], strides = [1, 1, 1]} : vector<1x16x32xf32> to vector<1x1x32xf32>
    %70 = vector.shape_cast %69 : vector<1x1x32xf32> to vector<1x32xf32>
    %71 = vector.extract_strided_slice %11 {offsets = [4, 0], sizes = [1, 32], strides = [1, 1]} : vector<7x32xf32> to vector<1x32xf32>
    %72 = arith.mulf %70, %71 : vector<1x32xf32>
    %73 = arith.addf %68, %72 : vector<1x32xf32>
    %74 = vector.extract_strided_slice %49 {offsets = [0, 2, 0], sizes = [1, 1, 32], strides = [1, 1, 1]} : vector<1x16x32xf32> to vector<1x1x32xf32>
    %75 = vector.shape_cast %74 : vector<1x1x32xf32> to vector<1x32xf32>
    %76 = vector.extract_strided_slice %11 {offsets = [5, 0], sizes = [1, 32], strides = [1, 1]} : vector<7x32xf32> to vector<1x32xf32>
    %77 = arith.mulf %75, %76 : vector<1x32xf32>
    %78 = arith.addf %73, %77 : vector<1x32xf32>
    %79 = vector.extract_strided_slice %49 {offsets = [0, 3, 0], sizes = [1, 1, 32], strides = [1, 1, 1]} : vector<1x16x32xf32> to vector<1x1x32xf32>
    %80 = vector.shape_cast %79 : vector<1x1x32xf32> to vector<1x32xf32>
    %81 = vector.extract_strided_slice %11 {offsets = [6, 0], sizes = [1, 32], strides = [1, 1]} : vector<7x32xf32> to vector<1x32xf32>
    %82 = arith.mulf %80, %81 : vector<1x32xf32>
    %83 = arith.addf %78, %82 : vector<1x32xf32>
    %84 = arith.addf %83, %5 : vector<1x32xf32>
    %85 = vector.shape_cast %84 : vector<1x32xf32> to vector<1x1x32xf32>
    %86 = vector.extract_strided_slice %49 {offsets = [0, 2, 0], sizes = [1, 1, 32], strides = [1, 1, 1]} : vector<1x16x32xf32> to vector<1x1x32xf32>
    %87 = vector.shape_cast %86 : vector<1x1x32xf32> to vector<1x32xf32>
    %88 = vector.extract_strided_slice %11 {offsets = [0, 0], sizes = [1, 32], strides = [1, 1]} : vector<7x32xf32> to vector<1x32xf32>
    %89 = arith.mulf %87, %88 : vector<1x32xf32>
    %90 = vector.extract_strided_slice %49 {offsets = [0, 1, 0], sizes = [1, 1, 32], strides = [1, 1, 1]} : vector<1x16x32xf32> to vector<1x1x32xf32>
    %91 = vector.shape_cast %90 : vector<1x1x32xf32> to vector<1x32xf32>
    %92 = vector.extract_strided_slice %11 {offsets = [1, 0], sizes = [1, 32], strides = [1, 1]} : vector<7x32xf32> to vector<1x32xf32>
    %93 = arith.mulf %91, %92 : vector<1x32xf32>
    %94 = arith.addf %89, %93 : vector<1x32xf32>
    %95 = vector.extract_strided_slice %49 {offsets = [0, 0, 0], sizes = [1, 1, 32], strides = [1, 1, 1]} : vector<1x16x32xf32> to vector<1x1x32xf32>
    %96 = vector.shape_cast %95 : vector<1x1x32xf32> to vector<1x32xf32>
    %97 = vector.extract_strided_slice %11 {offsets = [2, 0], sizes = [1, 32], strides = [1, 1]} : vector<7x32xf32> to vector<1x32xf32>
    %98 = arith.mulf %96, %97 : vector<1x32xf32>
    %99 = arith.addf %94, %98 : vector<1x32xf32>
    %100 = vector.extract_strided_slice %49 {offsets = [0, 1, 0], sizes = [1, 1, 32], strides = [1, 1, 1]} : vector<1x16x32xf32> to vector<1x1x32xf32>
    %101 = vector.shape_cast %100 : vector<1x1x32xf32> to vector<1x32xf32>
    %102 = vector.extract_strided_slice %11 {offsets = [3, 0], sizes = [1, 32], strides = [1, 1]} : vector<7x32xf32> to vector<1x32xf32>
    %103 = arith.mulf %101, %102 : vector<1x32xf32>
    %104 = arith.addf %99, %103 : vector<1x32xf32>
    %105 = vector.extract_strided_slice %49 {offsets = [0, 2, 0], sizes = [1, 1, 32], strides = [1, 1, 1]} : vector<1x16x32xf32> to vector<1x1x32xf32>
    %106 = vector.shape_cast %105 : vector<1x1x32xf32> to vector<1x32xf32>
    %107 = vector.extract_strided_slice %11 {offsets = [4, 0], sizes = [1, 32], strides = [1, 1]} : vector<7x32xf32> to vector<1x32xf32>
    %108 = arith.mulf %106, %107 : vector<1x32xf32>
    %109 = arith.addf %104, %108 : vector<1x32xf32>
    %110 = vector.extract_strided_slice %49 {offsets = [0, 3, 0], sizes = [1, 1, 32], strides = [1, 1, 1]} : vector<1x16x32xf32> to vector<1x1x32xf32>
    %111 = vector.shape_cast %110 : vector<1x1x32xf32> to vector<1x32xf32>
    %112 = vector.extract_strided_slice %11 {offsets = [5, 0], sizes = [1, 32], strides = [1, 1]} : vector<7x32xf32> to vector<1x32xf32>
    %113 = arith.mulf %111, %112 : vector<1x32xf32>
    %114 = arith.addf %109, %113 : vector<1x32xf32>
    %115 = vector.extract_strided_slice %49 {offsets = [0, 4, 0], sizes = [1, 1, 32], strides = [1, 1, 1]} : vector<1x16x32xf32> to vector<1x1x32xf32>
    %116 = vector.shape_cast %115 : vector<1x1x32xf32> to vector<1x32xf32>
    %117 = vector.extract_strided_slice %11 {offsets = [6, 0], sizes = [1, 32], strides = [1, 1]} : vector<7x32xf32> to vector<1x32xf32>
    %118 = arith.mulf %116, %117 : vector<1x32xf32>
    %119 = arith.addf %114, %118 : vector<1x32xf32>
    %120 = arith.addf %119, %5 : vector<1x32xf32>
    %121 = vector.shape_cast %120 : vector<1x32xf32> to vector<1x1x32xf32>
    %122 = vector.extract_strided_slice %49 {offsets = [0, 1, 0], sizes = [1, 1, 32], strides = [1, 1, 1]} : vector<1x16x32xf32> to vector<1x1x32xf32>
    %123 = vector.shape_cast %122 : vector<1x1x32xf32> to vector<1x32xf32>
    %124 = vector.extract_strided_slice %11 {offsets = [0, 0], sizes = [1, 32], strides = [1, 1]} : vector<7x32xf32> to vector<1x32xf32>
    %125 = arith.mulf %123, %124 : vector<1x32xf32>
    %126 = vector.extract_strided_slice %49 {offsets = [0, 0, 0], sizes = [1, 1, 32], strides = [1, 1, 1]} : vector<1x16x32xf32> to vector<1x1x32xf32>
    %127 = vector.shape_cast %126 : vector<1x1x32xf32> to vector<1x32xf32>
    %128 = vector.extract_strided_slice %11 {offsets = [1, 0], sizes = [1, 32], strides = [1, 1]} : vector<7x32xf32> to vector<1x32xf32>
    %129 = arith.mulf %127, %128 : vector<1x32xf32>
    %130 = arith.addf %125, %129 : vector<1x32xf32>
    %131 = vector.extract_strided_slice %49 {offsets = [0, 1, 0], sizes = [1, 1, 32], strides = [1, 1, 1]} : vector<1x16x32xf32> to vector<1x1x32xf32>
    %132 = vector.shape_cast %131 : vector<1x1x32xf32> to vector<1x32xf32>
    %133 = vector.extract_strided_slice %11 {offsets = [2, 0], sizes = [1, 32], strides = [1, 1]} : vector<7x32xf32> to vector<1x32xf32>
    %134 = arith.mulf %132, %133 : vector<1x32xf32>
    %135 = arith.addf %130, %134 : vector<1x32xf32>
    %136 = vector.extract_strided_slice %49 {offsets = [0, 2, 0], sizes = [1, 1, 32], strides = [1, 1, 1]} : vector<1x16x32xf32> to vector<1x1x32xf32>
    %137 = vector.shape_cast %136 : vector<1x1x32xf32> to vector<1x32xf32>
    %138 = vector.extract_strided_slice %11 {offsets = [3, 0], sizes = [1, 32], strides = [1, 1]} : vector<7x32xf32> to vector<1x32xf32>
    %139 = arith.mulf %137, %138 : vector<1x32xf32>
    %140 = arith.addf %135, %139 : vector<1x32xf32>
    %141 = vector.extract_strided_slice %49 {offsets = [0, 3, 0], sizes = [1, 1, 32], strides = [1, 1, 1]} : vector<1x16x32xf32> to vector<1x1x32xf32>
    %142 = vector.shape_cast %141 : vector<1x1x32xf32> to vector<1x32xf32>
    %143 = vector.extract_strided_slice %11 {offsets = [4, 0], sizes = [1, 32], strides = [1, 1]} : vector<7x32xf32> to vector<1x32xf32>
    %144 = arith.mulf %142, %143 : vector<1x32xf32>
    %145 = arith.addf %140, %144 : vector<1x32xf32>
    %146 = vector.extract_strided_slice %49 {offsets = [0, 4, 0], sizes = [1, 1, 32], strides = [1, 1, 1]} : vector<1x16x32xf32> to vector<1x1x32xf32>
    %147 = vector.shape_cast %146 : vector<1x1x32xf32> to vector<1x32xf32>
    %148 = vector.extract_strided_slice %11 {offsets = [5, 0], sizes = [1, 32], strides = [1, 1]} : vector<7x32xf32> to vector<1x32xf32>
    %149 = arith.mulf %147, %148 : vector<1x32xf32>
    %150 = arith.addf %145, %149 : vector<1x32xf32>
    %151 = vector.extract_strided_slice %49 {offsets = [0, 5, 0], sizes = [1, 1, 32], strides = [1, 1, 1]} : vector<1x16x32xf32> to vector<1x1x32xf32>
    %152 = vector.shape_cast %151 : vector<1x1x32xf32> to vector<1x32xf32>
    %153 = vector.extract_strided_slice %11 {offsets = [6, 0], sizes = [1, 32], strides = [1, 1]} : vector<7x32xf32> to vector<1x32xf32>
    %154 = arith.mulf %152, %153 : vector<1x32xf32>
    %155 = arith.addf %150, %154 : vector<1x32xf32>
    %156 = arith.addf %155, %5 : vector<1x32xf32>
    %157 = vector.shape_cast %156 : vector<1x32xf32> to vector<1x1x32xf32>
    %158 = vector.extract_strided_slice %48 {offsets = [0, 3, 0], sizes = [1, 10, 32], strides = [1, 1, 1]} : vector<1x16x32xf32> to vector<1x10x32xf32>
    %159 = vector.extract_strided_slice %49 {offsets = [0, 10, 0], sizes = [1, 1, 32], strides = [1, 1, 1]} : vector<1x16x32xf32> to vector<1x1x32xf32>
    %160 = vector.shape_cast %159 : vector<1x1x32xf32> to vector<1x32xf32>
    %161 = vector.extract_strided_slice %11 {offsets = [0, 0], sizes = [1, 32], strides = [1, 1]} : vector<7x32xf32> to vector<1x32xf32>
    %162 = arith.mulf %160, %161 : vector<1x32xf32>
    %163 = vector.extract_strided_slice %49 {offsets = [0, 11, 0], sizes = [1, 1, 32], strides = [1, 1, 1]} : vector<1x16x32xf32> to vector<1x1x32xf32>
    %164 = vector.shape_cast %163 : vector<1x1x32xf32> to vector<1x32xf32>
    %165 = vector.extract_strided_slice %11 {offsets = [1, 0], sizes = [1, 32], strides = [1, 1]} : vector<7x32xf32> to vector<1x32xf32>
    %166 = arith.mulf %164, %165 : vector<1x32xf32>
    %167 = arith.addf %162, %166 : vector<1x32xf32>
    %168 = vector.extract_strided_slice %49 {offsets = [0, 12, 0], sizes = [1, 1, 32], strides = [1, 1, 1]} : vector<1x16x32xf32> to vector<1x1x32xf32>
    %169 = vector.shape_cast %168 : vector<1x1x32xf32> to vector<1x32xf32>
    %170 = vector.extract_strided_slice %11 {offsets = [2, 0], sizes = [1, 32], strides = [1, 1]} : vector<7x32xf32> to vector<1x32xf32>
    %171 = arith.mulf %169, %170 : vector<1x32xf32>
    %172 = arith.addf %167, %171 : vector<1x32xf32>
    %173 = vector.extract_strided_slice %49 {offsets = [0, 13, 0], sizes = [1, 1, 32], strides = [1, 1, 1]} : vector<1x16x32xf32> to vector<1x1x32xf32>
    %174 = vector.shape_cast %173 : vector<1x1x32xf32> to vector<1x32xf32>
    %175 = vector.extract_strided_slice %11 {offsets = [3, 0], sizes = [1, 32], strides = [1, 1]} : vector<7x32xf32> to vector<1x32xf32>
    %176 = arith.mulf %174, %175 : vector<1x32xf32>
    %177 = arith.addf %172, %176 : vector<1x32xf32>
    %178 = vector.extract_strided_slice %49 {offsets = [0, 14, 0], sizes = [1, 1, 32], strides = [1, 1, 1]} : vector<1x16x32xf32> to vector<1x1x32xf32>
    %179 = vector.shape_cast %178 : vector<1x1x32xf32> to vector<1x32xf32>
    %180 = vector.extract_strided_slice %11 {offsets = [4, 0], sizes = [1, 32], strides = [1, 1]} : vector<7x32xf32> to vector<1x32xf32>
    %181 = arith.mulf %179, %180 : vector<1x32xf32>
    %182 = arith.addf %177, %181 : vector<1x32xf32>
    %183 = vector.extract_strided_slice %49 {offsets = [0, 15, 0], sizes = [1, 1, 32], strides = [1, 1, 1]} : vector<1x16x32xf32> to vector<1x1x32xf32>
    %184 = vector.shape_cast %183 : vector<1x1x32xf32> to vector<1x32xf32>
    %185 = vector.extract_strided_slice %11 {offsets = [5, 0], sizes = [1, 32], strides = [1, 1]} : vector<7x32xf32> to vector<1x32xf32>
    %186 = arith.mulf %184, %185 : vector<1x32xf32>
    %187 = arith.addf %182, %186 : vector<1x32xf32>
    %188 = vector.extract_strided_slice %49 {offsets = [0, 14, 0], sizes = [1, 1, 32], strides = [1, 1, 1]} : vector<1x16x32xf32> to vector<1x1x32xf32>
    %189 = vector.shape_cast %188 : vector<1x1x32xf32> to vector<1x32xf32>
    %190 = vector.extract_strided_slice %11 {offsets = [6, 0], sizes = [1, 32], strides = [1, 1]} : vector<7x32xf32> to vector<1x32xf32>
    %191 = arith.mulf %189, %190 : vector<1x32xf32>
    %192 = arith.addf %187, %191 : vector<1x32xf32>
    %193 = arith.addf %192, %5 : vector<1x32xf32>
    %194 = vector.shape_cast %193 : vector<1x32xf32> to vector<1x1x32xf32>
    %195 = vector.extract_strided_slice %49 {offsets = [0, 11, 0], sizes = [1, 1, 32], strides = [1, 1, 1]} : vector<1x16x32xf32> to vector<1x1x32xf32>
    %196 = vector.shape_cast %195 : vector<1x1x32xf32> to vector<1x32xf32>
    %197 = vector.extract_strided_slice %11 {offsets = [0, 0], sizes = [1, 32], strides = [1, 1]} : vector<7x32xf32> to vector<1x32xf32>
    %198 = arith.mulf %196, %197 : vector<1x32xf32>
    %199 = vector.extract_strided_slice %49 {offsets = [0, 12, 0], sizes = [1, 1, 32], strides = [1, 1, 1]} : vector<1x16x32xf32> to vector<1x1x32xf32>
    %200 = vector.shape_cast %199 : vector<1x1x32xf32> to vector<1x32xf32>
    %201 = vector.extract_strided_slice %11 {offsets = [1, 0], sizes = [1, 32], strides = [1, 1]} : vector<7x32xf32> to vector<1x32xf32>
    %202 = arith.mulf %200, %201 : vector<1x32xf32>
    %203 = arith.addf %198, %202 : vector<1x32xf32>
    %204 = vector.extract_strided_slice %49 {offsets = [0, 13, 0], sizes = [1, 1, 32], strides = [1, 1, 1]} : vector<1x16x32xf32> to vector<1x1x32xf32>
    %205 = vector.shape_cast %204 : vector<1x1x32xf32> to vector<1x32xf32>
    %206 = vector.extract_strided_slice %11 {offsets = [2, 0], sizes = [1, 32], strides = [1, 1]} : vector<7x32xf32> to vector<1x32xf32>
    %207 = arith.mulf %205, %206 : vector<1x32xf32>
    %208 = arith.addf %203, %207 : vector<1x32xf32>
    %209 = vector.extract_strided_slice %49 {offsets = [0, 14, 0], sizes = [1, 1, 32], strides = [1, 1, 1]} : vector<1x16x32xf32> to vector<1x1x32xf32>
    %210 = vector.shape_cast %209 : vector<1x1x32xf32> to vector<1x32xf32>
    %211 = vector.extract_strided_slice %11 {offsets = [3, 0], sizes = [1, 32], strides = [1, 1]} : vector<7x32xf32> to vector<1x32xf32>
    %212 = arith.mulf %210, %211 : vector<1x32xf32>
    %213 = arith.addf %208, %212 : vector<1x32xf32>
    %214 = vector.extract_strided_slice %49 {offsets = [0, 15, 0], sizes = [1, 1, 32], strides = [1, 1, 1]} : vector<1x16x32xf32> to vector<1x1x32xf32>
    %215 = vector.shape_cast %214 : vector<1x1x32xf32> to vector<1x32xf32>
    %216 = vector.extract_strided_slice %11 {offsets = [4, 0], sizes = [1, 32], strides = [1, 1]} : vector<7x32xf32> to vector<1x32xf32>
    %217 = arith.mulf %215, %216 : vector<1x32xf32>
    %218 = arith.addf %213, %217 : vector<1x32xf32>
    %219 = vector.extract_strided_slice %49 {offsets = [0, 14, 0], sizes = [1, 1, 32], strides = [1, 1, 1]} : vector<1x16x32xf32> to vector<1x1x32xf32>
    %220 = vector.shape_cast %219 : vector<1x1x32xf32> to vector<1x32xf32>
    %221 = vector.extract_strided_slice %11 {offsets = [5, 0], sizes = [1, 32], strides = [1, 1]} : vector<7x32xf32> to vector<1x32xf32>
    %222 = arith.mulf %220, %221 : vector<1x32xf32>
    %223 = arith.addf %218, %222 : vector<1x32xf32>
    %224 = vector.extract_strided_slice %49 {offsets = [0, 13, 0], sizes = [1, 1, 32], strides = [1, 1, 1]} : vector<1x16x32xf32> to vector<1x1x32xf32>
    %225 = vector.shape_cast %224 : vector<1x1x32xf32> to vector<1x32xf32>
    %226 = vector.extract_strided_slice %11 {offsets = [6, 0], sizes = [1, 32], strides = [1, 1]} : vector<7x32xf32> to vector<1x32xf32>
    %227 = arith.mulf %225, %226 : vector<1x32xf32>
    %228 = arith.addf %223, %227 : vector<1x32xf32>
    %229 = arith.addf %228, %5 : vector<1x32xf32>
    %230 = vector.shape_cast %229 : vector<1x32xf32> to vector<1x1x32xf32>
    %231 = vector.extract_strided_slice %49 {offsets = [0, 12, 0], sizes = [1, 1, 32], strides = [1, 1, 1]} : vector<1x16x32xf32> to vector<1x1x32xf32>
    %232 = vector.shape_cast %231 : vector<1x1x32xf32> to vector<1x32xf32>
    %233 = vector.extract_strided_slice %11 {offsets = [0, 0], sizes = [1, 32], strides = [1, 1]} : vector<7x32xf32> to vector<1x32xf32>
    %234 = arith.mulf %232, %233 : vector<1x32xf32>
    %235 = vector.extract_strided_slice %49 {offsets = [0, 13, 0], sizes = [1, 1, 32], strides = [1, 1, 1]} : vector<1x16x32xf32> to vector<1x1x32xf32>
    %236 = vector.shape_cast %235 : vector<1x1x32xf32> to vector<1x32xf32>
    %237 = vector.extract_strided_slice %11 {offsets = [1, 0], sizes = [1, 32], strides = [1, 1]} : vector<7x32xf32> to vector<1x32xf32>
    %238 = arith.mulf %236, %237 : vector<1x32xf32>
    %239 = arith.addf %234, %238 : vector<1x32xf32>
    %240 = vector.extract_strided_slice %49 {offsets = [0, 14, 0], sizes = [1, 1, 32], strides = [1, 1, 1]} : vector<1x16x32xf32> to vector<1x1x32xf32>
    %241 = vector.shape_cast %240 : vector<1x1x32xf32> to vector<1x32xf32>
    %242 = vector.extract_strided_slice %11 {offsets = [2, 0], sizes = [1, 32], strides = [1, 1]} : vector<7x32xf32> to vector<1x32xf32>
    %243 = arith.mulf %241, %242 : vector<1x32xf32>
    %244 = arith.addf %239, %243 : vector<1x32xf32>
    %245 = vector.extract_strided_slice %49 {offsets = [0, 15, 0], sizes = [1, 1, 32], strides = [1, 1, 1]} : vector<1x16x32xf32> to vector<1x1x32xf32>
    %246 = vector.shape_cast %245 : vector<1x1x32xf32> to vector<1x32xf32>
    %247 = vector.extract_strided_slice %11 {offsets = [3, 0], sizes = [1, 32], strides = [1, 1]} : vector<7x32xf32> to vector<1x32xf32>
    %248 = arith.mulf %246, %247 : vector<1x32xf32>
    %249 = arith.addf %244, %248 : vector<1x32xf32>
    %250 = vector.extract_strided_slice %49 {offsets = [0, 14, 0], sizes = [1, 1, 32], strides = [1, 1, 1]} : vector<1x16x32xf32> to vector<1x1x32xf32>
    %251 = vector.shape_cast %250 : vector<1x1x32xf32> to vector<1x32xf32>
    %252 = vector.extract_strided_slice %11 {offsets = [4, 0], sizes = [1, 32], strides = [1, 1]} : vector<7x32xf32> to vector<1x32xf32>
    %253 = arith.mulf %251, %252 : vector<1x32xf32>
    %254 = arith.addf %249, %253 : vector<1x32xf32>
    %255 = vector.extract_strided_slice %49 {offsets = [0, 13, 0], sizes = [1, 1, 32], strides = [1, 1, 1]} : vector<1x16x32xf32> to vector<1x1x32xf32>
    %256 = vector.shape_cast %255 : vector<1x1x32xf32> to vector<1x32xf32>
    %257 = vector.extract_strided_slice %11 {offsets = [5, 0], sizes = [1, 32], strides = [1, 1]} : vector<7x32xf32> to vector<1x32xf32>
    %258 = arith.mulf %256, %257 : vector<1x32xf32>
    %259 = arith.addf %254, %258 : vector<1x32xf32>
    %260 = vector.extract_strided_slice %49 {offsets = [0, 12, 0], sizes = [1, 1, 32], strides = [1, 1, 1]} : vector<1x16x32xf32> to vector<1x1x32xf32>
    %261 = vector.shape_cast %260 : vector<1x1x32xf32> to vector<1x32xf32>
    %262 = vector.extract_strided_slice %11 {offsets = [6, 0], sizes = [1, 32], strides = [1, 1]} : vector<7x32xf32> to vector<1x32xf32>
    %263 = arith.mulf %261, %262 : vector<1x32xf32>
    %264 = arith.addf %259, %263 : vector<1x32xf32>
    %265 = arith.addf %264, %5 : vector<1x32xf32>
    %266 = vector.shape_cast %265 : vector<1x32xf32> to vector<1x1x32xf32>
    %267 = tpu.concatenate %85, %121, %157, %158, %194, %230, %266 in 1 : vector<1x1x32xf32>, vector<1x1x32xf32>, vector<1x1x32xf32>, vector<1x10x32xf32>, vector<1x1x32xf32>, vector<1x1x32xf32>, vector<1x1x32xf32> -> vector<1x16x32xf32>
    %268 = vector.shape_cast %267 : vector<1x16x32xf32> to vector<16x32xf32>
    %269 = arith.truncf %268 : vector<16x32xf32> to vector<16x32xbf16>
    %c0_8 = arith.constant 0 : index
    %c0_9 = arith.constant 0 : index
    %c0_10 = arith.constant 0 : index
    %270 = vector.load %arg7[%c0_8, %c0_9, %c0_10] : memref<1x32x64xbf16, #tpu.memory_space<vmem>>, vector<1x32x64xbf16>
    %271 = vector.shape_cast %270 : vector<1x32x64xbf16> to vector<32x64xbf16>
    %cst = arith.constant dense<0.000000e+00> : vector<16x64xf32>
    %272 = tpu.matmul %269, %271, %cst {dimension_numbers = #tpu.dot_dimension_numbers<[1], [0], [0], [1], [0, 0, 1, 1], [], []>} : vector<16x32xbf16>, vector<32x64xbf16>, vector<16x64xf32> -> vector<16x64xf32>
    %273 = vector.broadcast %7 : vector<1x64xf32> to vector<16x64xf32>
    %274 = arith.addf %272, %273 : vector<16x64xf32>
    %cst_11 = arith.constant 0.707106769 : f32
    %275 = vector.broadcast %cst_11 : f32 to vector<16x64xf32>
    %276 = arith.mulf %274, %275 : vector<16x64xf32>
    %cst_12 = arith.constant 0.000000e+00 : f32
    %277 = vector.broadcast %cst_12 : f32 to vector<16x64xf32>
    %278 = arith.cmpf olt, %276, %277 : vector<16x64xf32>
    %cst_13 = arith.constant -1.000000e+00 : f32
    %cst_14 = arith.constant 1.000000e+00 : f32
    %279 = vector.broadcast %cst_13 : f32 to vector<16x64xf32>
    %280 = vector.broadcast %cst_14 : f32 to vector<16x64xf32>
    %281 = arith.select %278, %279, %280 : vector<16x64xi1>, vector<16x64xf32>
    %282 = math.absf %276 : vector<16x64xf32>
    %cst_15 = arith.constant 0.327591091 : f32
    %283 = vector.broadcast %cst_15 : f32 to vector<16x64xf32>
    %284 = arith.mulf %283, %282 : vector<16x64xf32>
    %cst_16 = arith.constant 1.000000e+00 : f32
    %285 = vector.broadcast %cst_16 : f32 to vector<16x64xf32>
    %286 = arith.addf %285, %284 : vector<16x64xf32>
    %287 = tpu.reciprocal %286 {approx = true} : vector<16x64xf32> -> vector<16x64xf32>
    %cst_17 = arith.constant 5.000000e-01 : f32
    %288 = vector.broadcast %cst_17 : f32 to vector<16x64xf32>
    %289 = arith.mulf %288, %274 : vector<16x64xf32>
    %cst_18 = arith.constant 1.06140542 : f32
    %290 = vector.broadcast %cst_18 : f32 to vector<16x64xf32>
    %291 = arith.mulf %290, %287 : vector<16x64xf32>
    %cst_19 = arith.constant -1.45315206 : f32
    %292 = vector.broadcast %cst_19 : f32 to vector<16x64xf32>
    %293 = arith.addf %291, %292 : vector<16x64xf32>
    %294 = arith.mulf %293, %287 : vector<16x64xf32>
    %cst_20 = arith.constant 1.42141378 : f32
    %295 = vector.broadcast %cst_20 : f32 to vector<16x64xf32>
    %296 = arith.addf %294, %295 : vector<16x64xf32>
    %297 = arith.mulf %296, %287 : vector<16x64xf32>
    %cst_21 = arith.constant -0.284496725 : f32
    %298 = vector.broadcast %cst_21 : f32 to vector<16x64xf32>
    %299 = arith.addf %297, %298 : vector<16x64xf32>
    %300 = arith.mulf %299, %287 : vector<16x64xf32>
    %cst_22 = arith.constant 0.254829586 : f32
    %301 = vector.broadcast %cst_22 : f32 to vector<16x64xf32>
    %302 = arith.addf %300, %301 : vector<16x64xf32>
    %303 = arith.mulf %302, %287 : vector<16x64xf32>
    %cst_23 = arith.constant 0.000000e+00 : f32
    %304 = vector.broadcast %cst_23 : f32 to vector<16x64xf32>
    %305 = arith.subf %304, %282 : vector<16x64xf32>
    %306 = arith.mulf %305, %282 : vector<16x64xf32>
    %307 = math.exp %306 : vector<16x64xf32>
    %308 = arith.mulf %303, %307 : vector<16x64xf32>
    %cst_24 = arith.constant 1.000000e+00 : f32
    %309 = vector.broadcast %cst_24 : f32 to vector<16x64xf32>
    %310 = arith.subf %309, %308 : vector<16x64xf32>
    %311 = arith.mulf %281, %310 : vector<16x64xf32>
    %cst_25 = arith.constant 1.000000e+00 : f32
    %312 = vector.broadcast %cst_25 : f32 to vector<16x64xf32>
    %313 = arith.addf %312, %311 : vector<16x64xf32>
    %314 = arith.mulf %289, %313 : vector<16x64xf32>
    %315 = vector.shape_cast %314 : vector<16x64xf32> to vector<1x16x64xf32>
    %316 = arith.mulf %315, %315 : vector<1x16x64xf32>
    %cst_26 = arith.constant dense<0.000000e+00> : vector<1x64xf32>
    %317 = vector.multi_reduction <add>, %316, %cst_26 [1] : vector<1x16x64xf32> to vector<1x64xf32>
    %318 = vector.shape_cast %317 : vector<1x64xf32> to vector<1x1x64xf32>
    %319 = math.sqrt %318 : vector<1x1x64xf32>
    %cst_27 = arith.constant dense<0.000000e+00> : vector<1x1xf32>
    %320 = vector.multi_reduction <add>, %319, %cst_27 [2] : vector<1x1x64xf32> to vector<1x1xf32>
    %321 = vector.shape_cast %320 : vector<1x1xf32> to vector<1x1x1xf32>
    %cst_28 = arith.constant 6.400000e+01 : f32
    %322 = vector.broadcast %cst_28 : f32 to vector<1x1x1xf32>
    %323 = arith.divf %321, %322 : vector<1x1x1xf32>
    %cst_29 = arith.constant 9.99999997E-7 : f32
    %324 = vector.broadcast %cst_29 : f32 to vector<1x1x1xf32>
    %325 = arith.addf %323, %324 : vector<1x1x1xf32>
    %326 = vector.broadcast %325 : vector<1x1x1xf32> to vector<1x1x64xf32>
    %327 = arith.divf %319, %326 : vector<1x1x64xf32>
    %328 = vector.shape_cast %8 : vector<1x64xf32> to vector<1x1x64xf32>
    %329 = vector.broadcast %327 : vector<1x1x64xf32> to vector<1x16x64xf32>
    %330 = arith.mulf %315, %329 : vector<1x16x64xf32>
    %331 = vector.broadcast %328 : vector<1x1x64xf32> to vector<1x16x64xf32>
    %332 = arith.mulf %331, %330 : vector<1x16x64xf32>
    %333 = vector.shape_cast %9 : vector<1x64xf32> to vector<1x1x64xf32>
    %334 = vector.broadcast %333 : vector<1x1x64xf32> to vector<1x16x64xf32>
    %335 = arith.addf %332, %334 : vector<1x16x64xf32>
    %336 = arith.addf %335, %315 : vector<1x16x64xf32>
    %337 = vector.shape_cast %336 : vector<1x16x64xf32> to vector<16x64xf32>
    %338 = arith.truncf %337 : vector<16x64xf32> to vector<16x64xbf16>
    %c0_30 = arith.constant 0 : index
    %c0_31 = arith.constant 0 : index
    %c0_32 = arith.constant 0 : index
    %339 = vector.load %arg8[%c0_30, %c0_31, %c0_32] : memref<1x64x32xbf16, #tpu.memory_space<vmem>>, vector<1x64x32xbf16>
    %340 = vector.shape_cast %339 : vector<1x64x32xbf16> to vector<64x32xbf16>
    %cst_33 = arith.constant dense<0.000000e+00> : vector<16x32xf32>
    %341 = tpu.matmul %338, %340, %cst_33 {dimension_numbers = #tpu.dot_dimension_numbers<[1], [0], [0], [1], [0, 0, 1, 1], [], []>} : vector<16x64xbf16>, vector<64x32xbf16>, vector<16x32xf32> -> vector<16x32xf32>
    %342 = vector.broadcast %6 : vector<1x32xf32> to vector<16x32xf32>
    %343 = arith.addf %341, %342 : vector<16x32xf32>
    %344 = arith.addf %12, %343 : vector<16x32xf32>
    %c1_i32_34 = arith.constant 1 : i32
    %345 = arith.cmpi slt, %arg1, %c1_i32_34 : i32
    %346 = arith.extui %345 : i1 to i32
    %c0_i32_35 = arith.constant 0 : i32
    %347 = arith.cmpi ne, %346, %c0_i32_35 : i32
    scf.if %347 {
      %c0_38 = arith.constant 0 : index
      %c0_39 = arith.constant 0 : index
      %351 = vector.load %arg11[%c0_38, %c0_39] : memref<16x32xf32, #tpu.memory_space<vmem>>, vector<16x32xf32>
      tpu.vector_store %arg11[%c0_38, %c0_39], %344 {strides = array<i32>} : memref<16x32xf32, #tpu.memory_space<vmem>>, vector<16x32xf32>,
    } else {
    }
    %c1_i32_36 = arith.constant 1 : i32
    %348 = arith.cmpi eq, %arg1, %c1_i32_36 : i32
    %349 = arith.extui %348 : i1 to i32
    %c0_i32_37 = arith.constant 0 : i32
    %350 = arith.cmpi ne, %349, %c0_i32_37 : i32
    scf.if %350 {
      %c0_38 = arith.constant 0 : index
      %c32 = arith.constant 32 : index
      %351 = vector.load %arg4[%c0_38, %c32] : memref<1x224xf32, #tpu.memory_space<vmem>>, vector<1x32xf32>
      %c0_39 = arith.constant 0 : index
      %c64 = arith.constant 64 : index
      %352 = vector.load %arg4[%c0_39, %c64] : memref<1x224xf32, #tpu.memory_space<vmem>>, vector<1x32xf32>
      %c0_40 = arith.constant 0 : index
      %c96 = arith.constant 96 : index
      %353 = vector.load %arg4[%c0_40, %c96] : memref<1x224xf32, #tpu.memory_space<vmem>>, vector<1x128xf32>
      %cst_41 = arith.constant dense<0.000000e+00> : vector<16xf32>
      %354 = vector.multi_reduction <add>, %344, %cst_41 [1] : vector<16x32xf32> to vector<16xf32>
      %355 = vector.shape_cast %354 : vector<16xf32> to vector<16x1xf32>
      %cst_42 = arith.constant 3.200000e+01 : f32
      %356 = vector.broadcast %cst_42 : f32 to vector<16x1xf32>
      %357 = arith.divf %355, %356 : vector<16x1xf32>
      %358 = vector.broadcast %357 : vector<16x1xf32> to vector<16x32xf32>
      %359 = arith.subf %344, %358 : vector<16x32xf32>
      %360 = arith.mulf %359, %359 : vector<16x32xf32>
      %cst_43 = arith.constant dense<0.000000e+00> : vector<16xf32>
      %361 = vector.multi_reduction <add>, %360, %cst_43 [1] : vector<16x32xf32> to vector<16xf32>
      %362 = vector.shape_cast %361 : vector<16xf32> to vector<16x1xf32>
      %cst_44 = arith.constant 3.200000e+01 : f32
      %363 = vector.broadcast %cst_44 : f32 to vector<16x1xf32>
      %364 = arith.divf %362, %363 : vector<16x1xf32>
      %cst_45 = arith.constant 9.99999997E-7 : f32
      %365 = vector.broadcast %cst_45 : f32 to vector<16x1xf32>
      %366 = arith.addf %364, %365 : vector<16x1xf32>
      %367 = math.rsqrt %366 : vector<16x1xf32>
      %368 = vector.broadcast %367 : vector<16x1xf32> to vector<16x32xf32>
      %369 = arith.mulf %359, %368 : vector<16x32xf32>
      %370 = vector.broadcast %351 : vector<1x32xf32> to vector<16x32xf32>
      %371 = arith.mulf %369, %370 : vector<16x32xf32>
      %372 = vector.broadcast %352 : vector<1x32xf32> to vector<16x32xf32>
      %373 = arith.addf %371, %372 : vector<16x32xf32>
      %374 = arith.truncf %373 : vector<16x32xf32> to vector<16x32xbf16>
      %c0_46 = arith.constant 0 : index
      %c0_47 = arith.constant 0 : index
      %375 = vector.load %arg9[%c0_46, %c0_47] : memref<32x128xbf16, #tpu.memory_space<vmem>>, vector<32x128xbf16>
      %cst_48 = arith.constant dense<0.000000e+00> : vector<16x128xf32>
      %376 = tpu.matmul %374, %375, %cst_48 {dimension_numbers = #tpu.dot_dimension_numbers<[1], [0], [0], [1], [0, 0, 1, 1], [], []>} : vector<16x32xbf16>, vector<32x128xbf16>, vector<16x128xf32> -> vector<16x128xf32>
      %377 = vector.broadcast %353 : vector<1x128xf32> to vector<16x128xf32>
      %378 = arith.addf %376, %377 : vector<16x128xf32>
      %379 = arith.truncf %378 : vector<16x128xf32> to vector<16x128xbf16>
      %c0_49 = arith.constant 0 : index
      %c0_50 = arith.constant 0 : index
      %380 = vector.load %arg10[%c0_49, %c0_50] : memref<16x128xbf16, #tpu.memory_space<vmem>>, vector<16x128xbf16>
      tpu.vector_store %arg10[%c0_49, %c0_50], %379 {strides = array<i32>} : memref<16x128xbf16, #tpu.memory_space<vmem>>, vector<16x128xbf16>,
    } else {
    }
    return
  }
  func.func @transform_0(%arg0: i32, %arg1: i32) -> (i32, i32) {
    %c0_i32 = arith.constant 0 : i32
    %c0_i32_0 = arith.constant 0 : i32
    return %arg0, %c0_i32 : i32, i32
  }
  func.func @transform_1(%arg0: i32, %arg1: i32) -> (i32, i32) {
    %c0_i32 = arith.constant 0 : i32
    %c0_i32_0 = arith.constant 0 : i32
    %c0_i32_1 = arith.constant 0 : i32
    return %c0_i32, %c0_i32_0 : i32, i32
  }
  func.func @transform_2(%arg0: i32, %arg1: i32) -> (i32, i32) {
    %c0_i32 = arith.constant 0 : i32
    %c0_i32_0 = arith.constant 0 : i32
    %c0_i32_1 = arith.constant 0 : i32
    return %c0_i32, %c0_i32_0 : i32, i32
  }
  func.func @transform_3(%arg0: i32, %arg1: i32) -> (i32, i32, i32) {
    %c0_i32 = arith.constant 0 : i32
    %c0_i32_0 = arith.constant 0 : i32
    %c0_i32_1 = arith.constant 0 : i32
    return %arg1, %c0_i32, %c0_i32_0 : i32, i32, i32
  }
  func.func @transform_4(%arg0: i32, %arg1: i32) -> (i32, i32, i32) {
    %c0_i32 = arith.constant 0 : i32
    %c0_i32_0 = arith.constant 0 : i32
    %c0_i32_1 = arith.constant 0 : i32
    return %arg1, %c0_i32, %c0_i32_0 : i32, i32, i32
  }
  func.func @transform_5(%arg0: i32, %arg1: i32) -> (i32, i32, i32) {
    %c0_i32 = arith.constant 0 : i32
    %c0_i32_0 = arith.constant 0 : i32
    %c0_i32_1 = arith.constant 0 : i32
    return %arg1, %c0_i32, %c0_i32_0 : i32, i32, i32
  }
  func.func @transform_6(%arg0: i32, %arg1: i32) -> (i32, i32, i32) {
    %c0_i32 = arith.constant 0 : i32
    %c0_i32_0 = arith.constant 0 : i32
    %c0_i32_1 = arith.constant 0 : i32
    return %arg1, %c0_i32, %c0_i32_0 : i32, i32, i32
  }
  func.func @transform_7(%arg0: i32, %arg1: i32) -> (i32, i32) {
    %c0_i32 = arith.constant 0 : i32
    %c0_i32_0 = arith.constant 0 : i32
    %c0_i32_1 = arith.constant 0 : i32
    return %c0_i32, %c0_i32_0 : i32, i32
  }
  func.func @transform_8(%arg0: i32, %arg1: i32) -> (i32, i32) {
    %c0_i32 = arith.constant 0 : i32
    %c0_i32_0 = arith.constant 0 : i32
    return %arg0, %c0_i32 : i32, i32
  }
}

</mosaic_0001>

<llo_original>
// kernel: tpu_custom_call.1
$region0: #{tpu_custom_call.1}
  #allocation0 [shape = 'u32[]', space=smem, size = 0x4, offset = 0x4, fixed_abs, tag = 'smem constant byte address 0x4 - core index']
  #allocation1 [shape = 'u32[144,128]{1,0:T(1,128)}', space=vmem, size = 0x12000, scoped, tag = 'internal scratch']
  #allocation2 [shape = 'f32[16,32]{1,0:T(8,128)}', space=vmem, size = 0x2000, scoped, tag = 'scratch operand']
  %s0 = inlined_call_operand.vmem [shape: bf16[32,8], index: 0, kind: input, shape index: {}]
  %s1 = inlined_call_operand.vmem [shape: bf16[8,32], index: 1, kind: input, shape index: {}]
  %s2 = inlined_call_operand.vmem [shape: f32[1,224], index: 2, kind: input, shape index: {}]
  %s3 = inlined_call_operand.vmem [shape: f32[2,7,32], index: 3, kind: input, shape index: {}]
  %s4 = inlined_call_operand.vmem [shape: f32[2,1,256], index: 4, kind: input, shape index: {}]
  %s5 = inlined_call_operand.vmem [shape: bf16[2,32,64], index: 5, kind: input, shape index: {}]
  %s6 = inlined_call_operand.vmem [shape: bf16[2,64,32], index: 6, kind: input, shape index: {}]
  %s7 = inlined_call_operand.vmem [shape: bf16[32,128], index: 7, kind: input, shape index: {}]
  %s8 = inlined_call_operand.hbm [shape: bf16[32,128], index: 8, kind: output, shape index: {}]
  %s9 = sld [smem:[#allocation0]]
  $region77: #{tpu_custom_call.1} parent=0
    _
  %s11 = ssub.s32 1, %s9
  %s12 = scalar_select 0, %s11, %s9
  $region1: #{tpu_custom_call.1} parent=0
    #allocation3 [shape = 'u8[8192]{0}', space=vmem, size = 0x2000, scoped, tag = 'output window, operand 0']
    #allocation4 [shape = 's32[2]{0}', space=sflag, size = 0x8, scoped, tag = 'scoped memory for tpu_custom_call.1']
    %13 = vsyncpa [#allocation4], 0
    %s14 = scalar_lea.sflag [#allocation4], 1
    %15 = vsyncpa %s14, 0
    loop: start=0, step=1, limit=6
    $region2: #{tpu_custom_call.1} parent=1 // loop_pre_header
      _
    $region3: #{tpu_custom_call.1} parent=1 // loop_header
      %s17 = sphi 0, %s21
      %p18 = scmp.ge.s32.totalorder %s17, 6
      %s24 = sphi 0, %s36
      %s25 = sphi 0, %s32
      %s26 = sphi 0, %s24
      %s27 = sphi 0, %s25
      %s28 = sphi 0, %s26
      %s29 = sphi 0, %s27
      %s39 = sphi 0, %s41
      %s42 = sphi 0, %s39
      %s43 = sphi 0, %s42
      %s59 = sphi 0, %s43
      %s63 = sphi 0, %s63
      %s65 = sphi 0, %s63
      %s66 = sphi 0, %s65
      %s80 = sphi 0, %s66
      %s84 = sphi 0, %s84
      %s86 = sphi 0, %s84
      %s87 = sphi 0, %s86
      %s101 = sphi 0, %s87
      %s107 = sphi 0, %s109
      %s110 = sphi 0, %s107
      %s111 = sphi 0, %s110
      %s127 = sphi 0, %s111
      %s133 = sphi 0, %s135
      %s136 = sphi 0, %s133
      %s137 = sphi 0, %s136
      %s153 = sphi 0, %s137
      %s159 = sphi 0, %s161
      %s162 = sphi 0, %s159
      %s163 = sphi 0, %s162
      %s179 = sphi 0, %s163
      %s185 = sphi 0, %s187
      %s188 = sphi 0, %s185
      %s189 = sphi 0, %s188
      %s205 = sphi 0, %s189
      %s209 = sphi 0, %s209
      %s211 = sphi 0, %s209
      %s212 = sphi 0, %s211
      %s226 = sphi 0, %s212
      %s232 = sphi 0, %s234
      %s235 = sphi 0, %s232
      %s236 = sphi 0, %s235
      %s252 = sphi 0, %s236
    $region4: #{tpu_custom_call.1} parent=1 // loop_header_branch
      %20 = sbr.rel (%p18) target = $region8
    $region5: #{tpu_custom_call.1} parent=1 // loop_body
      %s22 = ssub.s32 %s17, 1
      %s23 = ssub.s32 %s17, 2
      %s30 = sadd.s32 1, %s25
      %p31 = scmp.ge.s32.totalorder %s30, 2
      %s32 = scalar_select %p31, 0, %s30
      %s33 = sadd.s32 1, %s24
      %s34 = scalar_select %p31, %s33, %s24
      %p35 = scmp.ge.s32.totalorder %s34, 2
      %s36 = scalar_select %p35, 0, %s34
      %s37 = ssub.s32 %s24, %s36
      %p38 = scmp.eq.s32.totalorder %s37, 0
      %s40 = sadd.s32 %s39, 1
      %s41 = scalar_select %p38, %s39, %s40
      %p44 = pneg %p38
      %p45 = scmp.eq.s32.totalorder %s17, 3
      %p46 = por %p44, %p45
      %p47 = scmp.ne.s32.totalorder %s39, %s42
      %p48 = scmp.eq.s32.totalorder %s17, 0
      %p49 = por %p47, %p48
      %p50 = scmp.ne.s32.totalorder %s39, %s42
      %p51 = scmp.eq.s32.totalorder %s22, 3
      %p52 = por %p50, %p51
      %p53 = scmp.ne.s32.totalorder %s42, %s43
      %p54 = scmp.eq.s32.totalorder %s22, 0
      %p55 = por %p53, %p54
      %p56 = scmp.ne.s32.totalorder %s42, %s43
      %p57 = scmp.eq.s32.totalorder %s23, 3
      %p58 = por %p56, %p57
      %p60 = scmp.ne.s32.totalorder %s43, %s59
      %p61 = scmp.eq.s32.totalorder %s23, 0
      %p62 = por %p60, %p61
      %s64 = sadd.s32 %s63, 1
      %p67 = scmp.eq.s32.totalorder %s17, 3
      %p68 = scmp.ne.s32.totalorder %s63, %s65
      %p69 = scmp.eq.s32.totalorder %s17, 0
      %p70 = por %p68, %p69
      %p71 = scmp.ne.s32.totalorder %s63, %s65
      %p72 = scmp.eq.s32.totalorder %s22, 3
      %p73 = por %p71, %p72
      %p74 = scmp.ne.s32.totalorder %s65, %s66
      %p75 = scmp.eq.s32.totalorder %s22, 0
      %p76 = por %p74, %p75
      %p77 = scmp.ne.s32.totalorder %s65, %s66
      %p78 = scmp.eq.s32.totalorder %s23, 3
      %p79 = por %p77, %p78
      %p81 = scmp.ne.s32.totalorder %s66, %s80
      %p82 = scmp.eq.s32.totalorder %s23, 0
      %p83 = por %p81, %p82
      %s85 = sadd.s32 %s84, 1
      %p88 = scmp.eq.s32.totalorder %s17, 3
      %p89 = scmp.ne.s32.totalorder %s84, %s86
      %p90 = scmp.eq.s32.totalorder %s17, 0
      %p91 = por %p89, %p90
      %p92 = scmp.ne.s32.totalorder %s84, %s86
      %p93 = scmp.eq.s32.totalorder %s22, 3
      %p94 = por %p92, %p93
      %p95 = scmp.ne.s32.totalorder %s86, %s87
      %p96 = scmp.eq.s32.totalorder %s22, 0
      %p97 = por %p95, %p96
      %p98 = scmp.ne.s32.totalorder %s86, %s87
      %p99 = scmp.eq.s32.totalorder %s23, 3
      %p100 = por %p98, %p99
      %p102 = scmp.ne.s32.totalorder %s87, %s101
      %p103 = scmp.eq.s32.totalorder %s23, 0
      %p104 = por %p102, %p103
      %s105 = ssub.s32 %s25, %s32
      %p106 = scmp.eq.s32.totalorder %s105, 0
      %s108 = sadd.s32 %s107, 1
      %s109 = scalar_select %p106, %s107, %s108
      %p112 = pneg %p106
      %p113 = scmp.eq.s32.totalorder %s17, 3
      %p114 = por %p112, %p113
      %p115 = scmp.ne.s32.totalorder %s107, %s110
      %p116 = scmp.eq.s32.totalorder %s17, 0
      %p117 = por %p115, %p116
      %p118 = scmp.ne.s32.totalorder %s107, %s110
      %p119 = scmp.eq.s32.totalorder %s22, 3
      %p120 = por %p118, %p119
      %p121 = scmp.ne.s32.totalorder %s110, %s111
      %p122 = scmp.eq.s32.totalorder %s22, 0
      %p123 = por %p121, %p122
      %p124 = scmp.ne.s32.totalorder %s110, %s111
      %p125 = scmp.eq.s32.totalorder %s23, 3
      %p126 = por %p124, %p125
      %p128 = scmp.ne.s32.totalorder %s111, %s127
      %p129 = scmp.eq.s32.totalorder %s23, 0
      %p130 = por %p128, %p129
      %s131 = ssub.s32 %s25, %s32
      %p132 = scmp.eq.s32.totalorder %s131, 0
      %s134 = sadd.s32 %s133, 1
      %s135 = scalar_select %p132, %s133, %s134
      %p138 = pneg %p132
      %p139 = scmp.eq.s32.totalorder %s17, 3
      %p140 = por %p138, %p139
      %p141 = scmp.ne.s32.totalorder %s133, %s136
      %p142 = scmp.eq.s32.totalorder %s17, 0
      %p143 = por %p141, %p142
      %p144 = scmp.ne.s32.totalorder %s133, %s136
      %p145 = scmp.eq.s32.totalorder %s22, 3
      %p146 = por %p144, %p145
      %p147 = scmp.ne.s32.totalorder %s136, %s137
      %p148 = scmp.eq.s32.totalorder %s22, 0
      %p149 = por %p147, %p148
      %p150 = scmp.ne.s32.totalorder %s136, %s137
      %p151 = scmp.eq.s32.totalorder %s23, 3
      %p152 = por %p150, %p151
      %p154 = scmp.ne.s32.totalorder %s137, %s153
      %p155 = scmp.eq.s32.totalorder %s23, 0
      %p156 = por %p154, %p155
      %s157 = ssub.s32 %s25, %s32
      %p158 = scmp.eq.s32.totalorder %s157, 0
      %s160 = sadd.s32 %s159, 1
      %s161 = scalar_select %p158, %s159, %s160
      %p164 = pneg %p158
      %p165 = scmp.eq.s32.totalorder %s17, 3
      %p166 = por %p164, %p165
      %p167 = scmp.ne.s32.totalorder %s159, %s162
      %p168 = scmp.eq.s32.totalorder %s17, 0
      %p169 = por %p167, %p168
      %p170 = scmp.ne.s32.totalorder %s159, %s162
      %p171 = scmp.eq.s32.totalorder %s22, 3
      %p172 = por %p170, %p171
      %p173 = scmp.ne.s32.totalorder %s162, %s163
      %p174 = scmp.eq.s32.totalorder %s22, 0
      %p175 = por %p173, %p174
      %p176 = scmp.ne.s32.totalorder %s162, %s163
      %p177 = scmp.eq.s32.totalorder %s23, 3
      %p178 = por %p176, %p177
      %p180 = scmp.ne.s32.totalorder %s163, %s179
      %p181 = scmp.eq.s32.totalorder %s23, 0
      %p182 = por %p180, %p181
      %s183 = ssub.s32 %s25, %s32
      %p184 = scmp.eq.s32.totalorder %s183, 0
      %s186 = sadd.s32 %s185, 1
      %s187 = scalar_select %p184, %s185, %s186
      %p190 = pneg %p184
      %p191 = scmp.eq.s32.totalorder %s17, 3
      %p192 = por %p190, %p191
      %p193 = scmp.ne.s32.totalorder %s185, %s188
      %p194 = scmp.eq.s32.totalorder %s17, 0
      %p195 = por %p193, %p194
      %p196 = scmp.ne.s32.totalorder %s185, %s188
      %p197 = scmp.eq.s32.totalorder %s22, 3
      %p198 = por %p196, %p197
      %p199 = scmp.ne.s32.totalorder %s188, %s189
      %p200 = scmp.eq.s32.totalorder %s22, 0
      %p201 = por %p199, %p200
      %p202 = scmp.ne.s32.totalorder %s188, %s189
      %p203 = scmp.eq.s32.totalorder %s23, 3
      %p204 = por %p202, %p203
      %p206 = scmp.ne.s32.totalorder %s189, %s205
      %p207 = scmp.eq.s32.totalorder %s23, 0
      %p208 = por %p206, %p207
      %s210 = sadd.s32 %s209, 1
      %p213 = scmp.eq.s32.totalorder %s17, 3
      %p214 = scmp.ne.s32.totalorder %s209, %s211
      %p215 = scmp.eq.s32.totalorder %s17, 0
      %p216 = por %p214, %p215
      %p217 = scmp.ne.s32.totalorder %s209, %s211
      %p218 = scmp.eq.s32.totalorder %s22, 3
      %p219 = por %p217, %p218
      %p220 = scmp.ne.s32.totalorder %s211, %s212
      %p221 = scmp.eq.s32.totalorder %s22, 0
      %p222 = por %p220, %p221
      %p223 = scmp.ne.s32.totalorder %s211, %s212
      %p224 = scmp.eq.s32.totalorder %s23, 3
      %p225 = por %p223, %p224
      %p227 = scmp.ne.s32.totalorder %s212, %s226
      %p228 = scmp.eq.s32.totalorder %s23, 0
      %p229 = por %p227, %p228
      %s230 = ssub.s32 %s24, %s36
      %p231 = scmp.eq.s32.totalorder %s230, 0
      %s233 = sadd.s32 %s232, 1
      %s234 = scalar_select %p231, %s232, %s233
      %p237 = pneg %p231
      %p238 = scmp.eq.s32.totalorder %s17, 3
      %p239 = por %p237, %p238
      %p240 = scmp.ne.s32.totalorder %s232, %s235
      %p241 = scmp.eq.s32.totalorder %s17, 0
      %p242 = por %p240, %p241
      %p243 = scmp.ne.s32.totalorder %s232, %s235
      %p244 = scmp.eq.s32.totalorder %s22, 3
      %p245 = por %p243, %p244
      %p246 = scmp.ne.s32.totalorder %s235, %s236
      %p247 = scmp.eq.s32.totalorder %s22, 0
      %p248 = por %p246, %p247
      %p249 = scmp.ne.s32.totalorder %s235, %s236
      %p250 = scmp.eq.s32.totalorder %s23, 3
      %p251 = por %p249, %p250
      %p253 = scmp.ne.s32.totalorder %s236, %s252
      %p254 = scmp.eq.s32.totalorder %s23, 0
      %p255 = por %p253, %p254
      %p256 = scmp.le.s32.totalorder 1, %s17
      %p257 = scmp.lt.s32.totalorder %s17, 5
      %p258 = pnand %p256, %p257
      %p259 = pneg %p258
      // Predicated region
      $region9: #{tpu_custom_call.1} parent=5 // pred_check
        _
      $region10: #{tpu_custom_call.1} parent=5 // pred_check_branch
        %261 = sbr.rel (%p258) target = $region12
      $region11: #{tpu_custom_call.1} parent=5 // pred_region
        %s262 = ssub.s32 %s17, 1
        // Predicated region
        $region13: #{tpu_custom_call.1} parent=11 // pred_check
          %p263 = pneg %p76
        $region14: #{tpu_custom_call.1} parent=11 // pred_check_branch
          %265 = sbr.rel (%p263) target = $region16
        $region15: #{tpu_custom_call.1} parent=11 // pred_region
          _
        $region16: #{tpu_custom_call.1} parent=11 // pred_fallthru
          _
        // Predicated region
        $region17: #{tpu_custom_call.1} parent=11 // pred_check
          %p266 = pneg %p97
        $region18: #{tpu_custom_call.1} parent=11 // pred_check_branch
          %268 = sbr.rel (%p266) target = $region20
        $region19: #{tpu_custom_call.1} parent=11 // pred_region
          _
        $region20: #{tpu_custom_call.1} parent=11 // pred_fallthru
          _
        // Predicated region
        $region21: #{tpu_custom_call.1} parent=11 // pred_check
          %p269 = pneg %p222
        $region22: #{tpu_custom_call.1} parent=11 // pred_check_branch
          %271 = sbr.rel (%p269) target = $region24
        $region23: #{tpu_custom_call.1} parent=11 // pred_region
          _
        $region24: #{tpu_custom_call.1} parent=11 // pred_fallthru
          _
      $region12: #{tpu_custom_call.1} parent=5 // pred_fallthru
        _
      %p272 = scmp.lt.s32.totalorder %s17, 4
      // Predicated region
      $region25: #{tpu_custom_call.1} parent=5 // pred_check
        %p273 = pneg %p272
      $region26: #{tpu_custom_call.1} parent=5 // pred_check_branch
        %275 = sbr.rel (%p273) target = $region28
      $region27: #{tpu_custom_call.1} parent=5 // pred_region
        // Predicated region
        $region29: #{tpu_custom_call.1} parent=27 // pred_check
          %p276 = pneg %p49
        $region30: #{tpu_custom_call.1} parent=27 // pred_check_branch
          %278 = sbr.rel (%p276) target = $region32
        $region31: #{tpu_custom_call.1} parent=27 // pred_region
          %s279 = smul.u32 2, %s24
          %p280 = scmp.lt.s32.totalorder %s279, 3
          %s281 = scalar_select %p280, %s279, 3
          %s282 = smul.addr %s281, 4
          %s283 = scalar_lea.vmem %s0, %s282
          %s284 = smul.u32 2, %s24
        $region32: #{tpu_custom_call.1} parent=27 // pred_fallthru
          _
        // Predicated region
        $region33: #{tpu_custom_call.1} parent=27 // pred_check
          %p285 = pneg %p117
        $region34: #{tpu_custom_call.1} parent=27 // pred_check_branch
          %287 = sbr.rel (%p285) target = $region36
        $region35: #{tpu_custom_call.1} parent=27 // pred_region
          %p288 = scmp.lt.s32.totalorder %s25, 1
          %s289 = scalar_select %p288, %s25, 1
          %s290 = smul.addr %s289, 8
          %s291 = scalar_lea.vmem %s3, %s290
        $region36: #{tpu_custom_call.1} parent=27 // pred_fallthru
          _
        // Predicated region
        $region37: #{tpu_custom_call.1} parent=27 // pred_check
          %p292 = pneg %p143
        $region38: #{tpu_custom_call.1} parent=27 // pred_check_branch
          %294 = sbr.rel (%p292) target = $region40
        $region39: #{tpu_custom_call.1} parent=27 // pred_region
          %p295 = scmp.lt.s32.totalorder %s25, 1
          %s296 = scalar_select %p295, %s25, 1
          %s297 = smul.addr %s296, 2
          %s298 = scalar_lea.vmem %s4, %s297
        $region40: #{tpu_custom_call.1} parent=27 // pred_fallthru
          _
        // Predicated region
        $region41: #{tpu_custom_call.1} parent=27 // pred_check
          %p299 = pneg %p169
        $region42: #{tpu_custom_call.1} parent=27 // pred_check_branch
          %301 = sbr.rel (%p299) target = $region44
        $region43: #{tpu_custom_call.1} parent=27 // pred_region
          %p302 = scmp.lt.s32.totalorder %s25, 1
          %s303 = scalar_select %p302, %s25, 1
          %s304 = smul.addr %s303, 4
          %s305 = smul.addr %s304, 4
          %s306 = scalar_lea.vmem %s5, %s305
        $region44: #{tpu_custom_call.1} parent=27 // pred_fallthru
          _
        // Predicated region
        $region45: #{tpu_custom_call.1} parent=27 // pred_check
          %p307 = pneg %p195
        $region46: #{tpu_custom_call.1} parent=27 // pred_check_branch
          %309 = sbr.rel (%p307) target = $region48
        $region47: #{tpu_custom_call.1} parent=27 // pred_region
          %p310 = scmp.lt.s32.totalorder %s25, 1
          %s311 = scalar_select %p310, %s25, 1
          %s312 = smul.addr %s311, 8
          %s313 = smul.addr %s312, 4
          %s314 = scalar_lea.vmem %s6, %s313
        $region48: #{tpu_custom_call.1} parent=27 // pred_fallthru
          _
      $region28: #{tpu_custom_call.1} parent=5 // pred_fallthru
        _
      %p315 = scmp.le.s32.totalorder 1, %s17
      %p316 = scmp.lt.s32.totalorder %s17, 5
      %p317 = pnand %p315, %p316
      %p318 = pneg %p317
      // Predicated region
      $region49: #{tpu_custom_call.1} parent=5 // pred_check
        _
      $region50: #{tpu_custom_call.1} parent=5 // pred_check_branch
        %320 = sbr.rel (%p317) target = $region52
      $region51: #{tpu_custom_call.1} parent=5 // pred_region
        %s321 = ssub.s32 %s17, 1
        %s322 = smul.u32 2, %s26
        %p323 = scmp.lt.s32.totalorder %s322, 3
        %s324 = scalar_select %p323, %s322, 3
        %s325 = smul.addr %s324, 4
        %s326 = scalar_lea.vmem %s0, %s325
        %p327 = pneg %p55
        %p328 = pneg %p52
        %p329 = pneg %p76
        %p330 = pneg %p73
        %p331 = pneg %p97
        %p332 = pneg %p94
        %p333 = scmp.lt.s32.totalorder %s27, 1
        %s334 = scalar_select %p333, %s27, 1
        %s335 = smul.addr %s334, 8
        %s336 = scalar_lea.vmem %s3, %s335
        %p337 = pneg %p123
        %p338 = pneg %p120
        %p339 = scmp.lt.s32.totalorder %s27, 1
        %s340 = scalar_select %p339, %s27, 1
        %s341 = smul.addr %s340, 2
        %s342 = scalar_lea.vmem %s4, %s341
        %p343 = pneg %p149
        %p344 = pneg %p146
        %p345 = scmp.lt.s32.totalorder %s27, 1
        %s346 = scalar_select %p345, %s27, 1
        %s347 = smul.addr %s346, 4
        %s348 = smul.addr %s347, 4
        %s349 = scalar_lea.vmem %s5, %s348
        %p350 = pneg %p175
        %p351 = pneg %p172
        %p352 = scmp.lt.s32.totalorder %s27, 1
        %s353 = scalar_select %p352, %s27, 1
        %s354 = smul.addr %s353, 8
        %s355 = smul.addr %s354, 4
        %s356 = scalar_lea.vmem %s6, %s355
        %p357 = pneg %p201
        %p358 = pneg %p198
        %p359 = pneg %p222
        %p360 = pneg %p219
        %p361 = pneg %p248
        %p362 = pneg %p245
        %s363 = sand.u32 %s235, 1
        %s364 = scalar_lea.sflag [#allocation4], %s363
        %s365 = sand.u32 %s235, 1
        %s366 = smul.addr %s365, 8
        %s367 = scalar_lea.vmem [#allocation3], %s366
        %s368 = smul.u32 2, %s26
        %p369 = scmp.lt.s32.totalorder %s368, 3
        %s370 = scalar_select %p369, %s368, 3
        %s371 = smul.addr %s370, 4
        %s372 = scalar_lea.vmem %s0, %s371
        %s373 = smul.u32 2, %s26
        %p374 = scmp.lt.s32.totalorder %s27, 1
        %s375 = scalar_select %p374, %s27, 1
        %s376 = smul.addr %s375, 8
        %s377 = scalar_lea.vmem %s3, %s376
        %p378 = scmp.lt.s32.totalorder %s27, 1
        %s379 = scalar_select %p378, %s27, 1
        %s380 = smul.addr %s379, 2
        %s381 = scalar_lea.vmem %s4, %s380
        %p382 = scmp.lt.s32.totalorder %s27, 1
        %s383 = scalar_select %p382, %s27, 1
        %s384 = smul.addr %s383, 4
        %s385 = smul.addr %s384, 4
        %s386 = scalar_lea.vmem %s5, %s385
        %p387 = scmp.lt.s32.totalorder %s27, 1
        %s388 = scalar_select %p387, %s27, 1
        %s389 = smul.addr %s388, 8
        %s390 = smul.addr %s389, 4
        %s391 = scalar_lea.vmem %s6, %s390
        %s392 = smul.u32 2, %s26
        %p394 = scmp.eq.s32.totalorder %s27, 0
        // Predicated region
        $region53: #{tpu_custom_call.1} parent=51 // pred_check
          %p395 = pneg %p394
        $region54: #{tpu_custom_call.1} parent=51 // pred_check_branch
          %397 = sbr.rel (%p395) target = $region56
        $region55: #{tpu_custom_call.1} parent=51 // pred_region
          %v398 = vld [vmem:[%s2] sm:$0x1]
          %v399 = vld [vmem:[%s372] sm:$0xf]
          %v400 = vld [vmem:[%s372 + $0x4] sm:$0xf]
          %v401 = vld [vmem:[%s1] sm:$0xf]
          %v403 = vlaneseq
          %v404 = vshrl.u32 %v403, 7
          %v405 = vsub.s32 0, %v404
          %v406 = vrot.slane %v398, %v405
          %v410 = vunpack.c.l.b16 %v399
          %v411 = vunpack.c.l.b16 %v400
          %v412 = vpack.c.b16 %v411, %v410
          %vm413 = vcmask 64512
          %v415 = vsel %vm413, %v412, 0
          %vm417 = vcmask 1043456
          %v419 = vsel %vm417, %v401, 0
          %421 = vmatprep.subr.bf16.mxu0 0
          %422 = vmatpush1.bf16.msra.mxu0 %v419
          %423 = vmatprep.subr.bf16.mxu0 0
          %424 = vmatpush1.bf16.msra.mxu0 0
          %425 = vmatprep.subr.bf16.mxu0 0
          %426 = vmatpush1.bf16.msra.mxu0 0
          %427 = vmatprep.subr.bf16.mxu0 0
          %428 = vmatpush1.bf16.msra.mxu0 0
          %429 = vmatprep.subr.bf16.mxu0 0
          %430 = vmatpush1.bf16.msra.mxu0 0
          %431 = vmatprep.subr.bf16.mxu0 0
          %432 = vmatpush1.bf16.msra.mxu0 0
          %433 = vmatprep.subr.bf16.mxu0 0
          %434 = vmatpush1.bf16.msra.mxu0 0
          %435 = vmatprep.subr.bf16.mxu0 0
          %436 = vmatpush1.bf16.msra.mxu0 0
          %437 = vmatprep.subr.bf16.mxu0 0
          %438 = vmatpush1.bf16.msra.mxu0 0
          %439 = vmatprep.subr.bf16.mxu0 0
          %440 = vmatpush1.bf16.msra.mxu0 0
          %441 = vmatprep.subr.bf16.mxu0 0
          %442 = vmatpush1.bf16.msra.mxu0 0
          %443 = vmatprep.subr.bf16.mxu0 0
          %444 = vmatpush1.bf16.msra.mxu0 0
          %445 = vmatprep.subr.bf16.mxu0 0
          %446 = vmatpush1.bf16.msra.mxu0 0
          %447 = vmatprep.subr.bf16.mxu0 0
          %448 = vmatpush1.bf16.msra.mxu0 0
          %449 = vmatprep.subr.bf16.mxu0 0
          %450 = vmatpush1.bf16.msra.mxu0 0
          %451 = vmatprep.subr.bf16.mxu0 0
          %452 = vmatpush1.bf16.msra.mxu0 0
          %453 = vmatprep.mubr.bf16.mxu0 0
          %454 = vmatmul.mubr.bf16.gmra.mrb[0].mxu0 %v415
          %v455 = vpop.f32.mrb[0].mxu0
          %v456 = vadd.f32 %v406, %v455
          %v457 = vpop.f32.mrb[0].mxu0
          %v458 = vpop.f32.mrb[0].mxu0
          %v459 = vadd.f32 %v406, %v458
          %v460 = vpop.f32.mrb[0].mxu0
          %461 = vdwg.mxu0
          %vm462 = vcmask 261120
          %463 = vst.msk [vmem:[#allocation2] sm:$0xff] %vm462, %v456
          %464 = vst.msk [vmem:[#allocation2 + $0x8] sm:$0xff] %vm462, %v459
        $region56: #{tpu_custom_call.1} parent=51 // pred_fallthru
          _
        %v465 = vld [vmem:[%s381] sm:$0x3]
        %v466 = vld [vmem:[%s377] sm:$0x7f]
        %v467 = vld [vmem:[#allocation2] sm:$0xff]
        %v468 = vld [vmem:[#allocation2 + $0x8] sm:$0xff]
        %v469 = vlaneseq
        %v470 = vshrl.u32 %v469, 7
        %v471 = vsub.s32 3, %v470
        %v472 = vrot.slane %v466, %v471
        %v473 = vmul.f32 %v467, %v472
        %v474 = vmul.f32 %v468, %v472
        %v475 = vrot.slane %v467, 5
        %v476 = vrot.slane %v468, 5
        %v477 = vlaneseq
        %v478 = vshrl.u32 %v477, 7
        %vm479 = vcmp.lt.s32.totalorder %v478, 3
        %v480 = vsel %vm479, %v475, %v476
        %v481 = vsel %vm479, %v476, %v475
        %v482 = vlaneseq
        %v483 = vshrl.u32 %v482, 7
        %v484 = vsub.s32 0, %v483
        %v485 = vrot.slane %v466, %v484
        %v486 = vmul.f32 %v481, %v485
        %v487 = vmul.f32 %v480, %v485
        %v488 = vadd.f32 %v473, %v486
        %v489 = vadd.f32 %v474, %v487
        %v490 = vrot.slane %v467, 6
        %v491 = vrot.slane %v468, 6
        %vm492 = vcmp.lt.s32.totalorder %v478, 2
        %v493 = vsel %vm492, %v490, %v491
        %v494 = vsel %vm492, %v491, %v490
        %v495 = vlaneseq
        %v496 = vshrl.u32 %v495, 7
        %v497 = vsub.s32 1, %v496
        %v498 = vrot.slane %v466, %v497
        %v499 = vmul.f32 %v494, %v498
        %v500 = vmul.f32 %v493, %v498
        %v501 = vadd.f32 %v488, %v499
        %v502 = vadd.f32 %v489, %v500
        %v503 = vrot.slane %v467, 7
        %v504 = vrot.slane %v468, 7
        %vm505 = vcmp.lt.s32.totalorder %v478, 1
        %v506 = vsel %vm505, %v503, %v504
        %v507 = vsel %vm505, %v504, %v503
        %v508 = vlaneseq
        %v509 = vshrl.u32 %v508, 7
        %v510 = vsub.s32 2, %v509
        %v511 = vrot.slane %v466, %v510
        %v512 = vmul.f32 %v507, %v511
        %v513 = vmul.f32 %v506, %v511
        %v514 = vadd.f32 %v501, %v512
        %v515 = vadd.f32 %v502, %v513
        %v516 = vrot.slane %v467, 1
        %v517 = vrot.slane %v468, 1
        %vm518 = vcmp.lt.s32.totalorder %v478, 7
        %v519 = vsel %vm518, %v516, %v517
        %v520 = vsel %vm518, %v517, %v516
        %v521 = vlaneseq
        %v522 = vshrl.u32 %v521, 7
        %v523 = vsub.s32 4, %v522
        %v524 = vrot.slane %v466, %v523
        %v525 = vmul.f32 %v519, %v524
        %v526 = vmul.f32 %v520, %v524
        %v527 = vadd.f32 %v514, %v525
        %v528 = vadd.f32 %v515, %v526
        %v529 = vrot.slane %v467, 2
        %v530 = vrot.slane %v468, 2
        %vm531 = vcmp.lt.s32.totalorder %v478, 6
        %v532 = vsel %vm531, %v529, %v530
        %v533 = vsel %vm531, %v530, %v529
        %v534 = vlaneseq
        %v535 = vshrl.u32 %v534, 7
        %v536 = vsub.s32 5, %v535
        %v537 = vrot.slane %v466, %v536
        %v538 = vmul.f32 %v532, %v537
        %v539 = vmul.f32 %v533, %v537
        %v540 = vadd.f32 %v527, %v538
        %v541 = vadd.f32 %v528, %v539
        %v542 = vrot.slane %v467, 3
        %v543 = vrot.slane %v468, 3
        %vm544 = vcmp.lt.s32.totalorder %v478, 5
        %v545 = vsel %vm544, %v542, %v543
        %v546 = vsel %vm544, %v543, %v542
        %v547 = vlaneseq
        %v548 = vshrl.u32 %v547, 7
        %v549 = vsub.s32 6, %v548
        %v550 = vrot.slane %v466, %v549
        %v551 = vmul.f32 %v545, %v550
        %v552 = vmul.f32 %v546, %v550
        %v553 = vadd.f32 %v540, %v551
        %v554 = vadd.f32 %v541, %v552
        %v556 = vlaneseq
        %v557 = vshrl.u32 %v556, 7
        %v558 = vsub.s32 0, %v557
        %v559 = vrot.slane %v465, %v558
        %v561 = vadd.f32 %v553, %v559
        %v562 = vadd.f32 %v554, %v559
        %v564 = vrot.slane %v466, 5
        %v566 = vmul.f32 %v467, %v564
        %v567 = vrot.slane %v466, 7
        %v569 = vmul.f32 %v467, %v567
        %v571 = vrot.slane %v569, 7
        %v573 = vadd.f32 %v566, %v571
        %v574 = vrot.slane %v466, 1
        %v576 = vmul.f32 %v467, %v574
        %v578 = vrot.slane %v576, 6
        %v580 = vadd.f32 %v573, %v578
        %v581 = vrot.slane %v466, 3
        %v583 = vmul.f32 %v467, %v581
        %v585 = vrot.slane %v583, 5
        %v587 = vadd.f32 %v580, %v585
        %v588 = vrot.slane %v583, 6
        %v590 = vadd.f32 %v587, %v588
        %v591 = vrot.slane %v583, 7
        %v593 = vadd.f32 %v590, %v591
        %v594 = vadd.f32 %v593, %v583
        %v595 = vadd.f32 %v594, %v559
        %v596 = vrot.slane %v466, 6
        %v598 = vmul.f32 %v467, %v596
        %v599 = vmul.f32 %v467, %v466
        %v601 = vrot.slane %v599, 7
        %v603 = vadd.f32 %v598, %v601
        %v604 = vrot.slane %v466, 2
        %v606 = vmul.f32 %v467, %v604
        %v608 = vrot.slane %v606, 6
        %v610 = vadd.f32 %v603, %v608
        %v611 = vrot.slane %v606, 7
        %v613 = vadd.f32 %v610, %v611
        %v614 = vadd.f32 %v613, %v606
        %v615 = vrot.slane %v606, 1
        %v617 = vadd.f32 %v614, %v615
        %v618 = vrot.slane %v606, 2
        %v620 = vadd.f32 %v617, %v618
        %v621 = vadd.f32 %v620, %v559
        %v622 = vrot.slane %v576, 7
        %v624 = vadd.f32 %v569, %v622
        %v625 = vadd.f32 %v624, %v576
        %v626 = vrot.slane %v576, 1
        %v628 = vadd.f32 %v625, %v626
        %v629 = vrot.slane %v576, 2
        %v631 = vadd.f32 %v628, %v629
        %v632 = vrot.slane %v576, 3
        %v634 = vadd.f32 %v631, %v632
        %v635 = vrot.slane %v576, 4
        %v637 = vadd.f32 %v634, %v635
        %v638 = vadd.f32 %v637, %v559
        %v639 = vmul.f32 %v468, %v596
        %v641 = vrot.slane %v639, 1
        %v643 = vadd.f32 %v639, %v641
        %v644 = vrot.slane %v639, 2
        %v646 = vadd.f32 %v643, %v644
        %v647 = vrot.slane %v639, 3
        %v649 = vadd.f32 %v646, %v647
        %v650 = vrot.slane %v639, 4
        %v652 = vadd.f32 %v649, %v650
        %v653 = vrot.slane %v639, 5
        %v655 = vadd.f32 %v652, %v653
        %v656 = vmul.f32 %v468, %v466
        %v658 = vrot.slane %v656, 4
        %v660 = vadd.f32 %v655, %v658
        %v661 = vadd.f32 %v660, %v559
        %v662 = vmul.f32 %v468, %v564
        %v664 = vrot.slane %v662, 1
        %v666 = vadd.f32 %v662, %v664
        %v667 = vrot.slane %v662, 2
        %v669 = vadd.f32 %v666, %v667
        %v670 = vrot.slane %v662, 3
        %v672 = vadd.f32 %v669, %v670
        %v673 = vrot.slane %v662, 4
        %v675 = vadd.f32 %v672, %v673
        %v676 = vmul.f32 %v468, %v567
        %v678 = vrot.slane %v676, 3
        %v680 = vadd.f32 %v675, %v678
        %v681 = vmul.f32 %v468, %v574
        %v683 = vrot.slane %v681, 2
        %v685 = vadd.f32 %v680, %v683
        %v686 = vadd.f32 %v685, %v559
        %v687 = vrot.slane %v466, 4
        %v689 = vmul.f32 %v468, %v687
        %v691 = vrot.slane %v689, 1
        %v693 = vadd.f32 %v689, %v691
        %v694 = vrot.slane %v689, 2
        %v696 = vadd.f32 %v693, %v694
        %v697 = vrot.slane %v689, 3
        %v699 = vadd.f32 %v696, %v697
        %v700 = vadd.f32 %v699, %v644
        %v701 = vrot.slane %v656, 1
        %v703 = vadd.f32 %v700, %v701
        %v704 = vmul.f32 %v468, %v604
        %v705 = vadd.f32 %v703, %v704
        %v706 = vadd.f32 %v705, %v559
        %v708 = vrot.slane %v595, 3
        %v711 = vrot.slane %v621, 1
        %v714 = vrot.slane %v638, 7
        %v717 = vrot.slane %v661, 5
        %v720 = vrot.slane %v686, 5
        %v723 = vrot.slane %v706, 5
        %vm725 = vcmask 1040384
        %v726 = vsel %vm725, %v708, %v711
        %vm727 = vcmask 1041408
        %v728 = vsel %vm727, %v726, %v714
        %vm729 = vcmask 1042432
        %v730 = vsel %vm729, %v728, %v561
        %vm731 = vcmask 1044480
        %v732 = vsel %vm731, %v562, %v717
        %vm733 = vcmask 1045504
        %v734 = vsel %vm733, %v732, %v720
        %vm735 = vcmask 1046528
        %v736 = vsel %vm735, %v734, %v723
        %v737 = vpack.c.bf16 %v736, %v730
        %v738 = vld [vmem:[%s386] sm:$0xf]
        %v739 = vld [vmem:[%s386 + $0x4] sm:$0xf]
        %v740 = vld [vmem:[%s386 + $0x8] sm:$0xf]
        %v741 = vld [vmem:[%s386 + $0xc] sm:$0xf]
        %v746 = vunpack.c.l.b16 %v738
        %v747 = vunpack.c.l.b16 %v739
        %v748 = vunpack.c.l.b16 %v740
        %v749 = vunpack.c.l.b16 %v741
        %v750 = vpack.c.b16 %v747, %v746
        %v751 = vpack.c.b16 %v749, %v748
        %754 = vrot.lane.b32.xlu0 %v559, 64
        %v755 = vpop.permute.xlu0 %754
        %vm757 = vcmask 261120
        %v759 = vsel %vm757, %v737, 0
        %761 = vmatprep.subr.bf16.mxu0 0
        %762 = vmatpush1.bf16.msra.mxu0 %v750
        %763 = vmatprep.subr.bf16.mxu0 0
        %764 = vmatpush1.bf16.msra.mxu0 %v751
        %765 = vmatprep.subr.bf16.mxu0 0
        %766 = vmatpush1.bf16.msra.mxu0 0
        %767 = vmatprep.subr.bf16.mxu0 0
        %768 = vmatpush1.bf16.msra.mxu0 0
        %769 = vmatprep.subr.bf16.mxu0 0
        %770 = vmatpush1.bf16.msra.mxu0 0
        %771 = vmatprep.subr.bf16.mxu0 0
        %772 = vmatpush1.bf16.msra.mxu0 0
        %773 = vmatprep.subr.bf16.mxu0 0
        %774 = vmatpush1.bf16.msra.mxu0 0
        %775 = vmatprep.subr.bf16.mxu0 0
        %776 = vmatpush1.bf16.msra.mxu0 0
        %777 = vmatprep.subr.bf16.mxu0 0
        %778 = vmatpush1.bf16.msra.mxu0 0
        %779 = vmatprep.subr.bf16.mxu0 0
        %780 = vmatpush1.bf16.msra.mxu0 0
        %781 = vmatprep.subr.bf16.mxu0 0
        %782 = vmatpush1.bf16.msra.mxu0 0
        %783 = vmatprep.subr.bf16.mxu0 0
        %784 = vmatpush1.bf16.msra.mxu0 0
        %785 = vmatprep.subr.bf16.mxu0 0
        %786 = vmatpush1.bf16.msra.mxu0 0
        %787 = vmatprep.subr.bf16.mxu0 0
        %788 = vmatpush1.bf16.msra.mxu0 0
        %789 = vmatprep.subr.bf16.mxu0 0
        %790 = vmatpush1.bf16.msra.mxu0 0
        %791 = vmatprep.subr.bf16.mxu0 0
        %792 = vmatpush1.bf16.msra.mxu0 0
        %793 = vmatprep.mubr.bf16.mxu0 0
        %794 = vmatmul.mubr.bf16.gmra.mrb[0].mxu0 %v759
        %v795 = vpop.f32.mrb[0].mxu0
        %v796 = vadd.f32 %v755, %v795
        %v797 = vpop.f32.mrb[0].mxu0
        %v798 = vpop.f32.mrb[0].mxu0
        %v799 = vadd.f32 %v755, %v798
        %v800 = vpop.f32.mrb[0].mxu0
        %801 = vdwg.mxu0
        %v802 = vmul.f32 %v796, 0.70710677
        %v803 = vmul.f32 %v799, 0.70710677
        %vm804 = vcmp.lt.f32.partialorder %v802, 0.0
        %vm805 = vcmp.lt.f32.partialorder %v803, 0.0
        %v806 = vsel %vm804, -1.0, 1.0
        %v807 = vsel %vm805, -1.0, 1.0
        %v808 = vand.u32 2147483647, %v802
        %v809 = vand.u32 2147483647, %v803
        %v810 = vmul.f32 %v808, 0.3275911
        %v811 = vmul.f32 %v809, 0.3275911
        %v812 = vadd.f32 %v810, 1.0
        %v813 = vadd.f32 %v811, 1.0
        %v814 = vrcp.pop %v812
        %v815 = vrcp.pop %v813
        %v816 = vmul.f32 %v796, 0.5
        %v817 = vmul.f32 %v799, 0.5
        %v818 = vmul.f32 %v814, 1.0614054
        %v819 = vmul.f32 %v815, 1.0614054
        %v820 = vadd.f32 %v818, -1.4531521
        %v821 = vadd.f32 %v819, -1.4531521
        %v822 = vmul.f32 %v820, %v814
        %v823 = vmul.f32 %v821, %v815
        %v824 = vadd.f32 %v822, 1.4214138
        %v825 = vadd.f32 %v823, 1.4214138
        %v826 = vmul.f32 %v824, %v814
        %v827 = vmul.f32 %v825, %v815
        %v828 = vadd.f32 %v826, -0.28449672
        %v829 = vadd.f32 %v827, -0.28449672
        %v830 = vmul.f32 %v828, %v814
        %v831 = vmul.f32 %v829, %v815
        %v832 = vadd.f32 %v830, 0.2548296
        %v833 = vadd.f32 %v831, 0.2548296
        %v834 = vmul.f32 %v832, %v814
        %v835 = vmul.f32 %v833, %v815
        %v836 = vsub.f32 0.0, %v808
        %v837 = vsub.f32 0.0, %v809
        %v838 = vmul.f32 %v836, %v808
        %v839 = vmul.f32 %v837, %v809
        %v840 = vmul.f32 %v838, 1.442695
        %v841 = vpow.pop %v840
        %v842 = vmul.f32 %v839, 1.442695
        %v843 = vpow.pop %v842
        %v844 = vmul.f32 %v834, %v841
        %v845 = vmul.f32 %v835, %v843
        %v846 = vsub.f32 1.0, %v844
        %v847 = vsub.f32 1.0, %v845
        %v848 = vmul.f32 %v806, %v846
        %v849 = vmul.f32 %v807, %v847
        %v850 = vadd.f32 %v848, 1.0
        %v851 = vadd.f32 %v849, 1.0
        %v852 = vmul.f32 %v816, %v850
        %v853 = vmul.f32 %v817, %v851
        %v854 = vmul.f32 %v852, %v852
        %v855 = vmul.f32 %v853, %v853
        %vm856 = vcmask 523264
        %v857 = vsel %vm856, %v854, 0.0
        %v858 = vsel %vm856, %v855, 0.0
        %v859 = vadd.f32 %v857, %v858
        %v860 = vrot.slane %v859, 4
        %v861 = vadd.f32 %v859, %v860
        %v862 = vrot.slane %v861, 2
        %v863 = vadd.f32 %v861, %v862
        %v864 = vrot.slane %v863, 1
        %v865 = vadd.f32 %v863, %v864
        %v866 = vrsqrt.pop %v865
        %v867 = vmul.f32 %v865, %v866
        %vm868 = vcmp.eq.f32.partialorder %v865, inf
        %v869 = vsel %vm868, %v865, %v867
        %vm870 = vcmp.eq.f32.partialorder %v865, 0.0
        %v871 = vand.u32 %v865, 2147483648
        %v872 = vsel %vm870, %v871, %v869
        %v873 = vsel %vm856, %v872, 0.0
        %874 = vadd.xlane.f32.xlu0 %v873
        %v875 = vpop.xlane.xlu0 %874
        %v876 = vrcp.pop 64.0
        %v877 = vmul.f32 %v875, %v876
        %v878 = vadd.f32 %v877, 1e-06
        %v879 = vrcp.pop %v878
        %v880 = vmul.f32 %v872, %v879
        %v881 = vmul.f32 %v852, %v880
        %v882 = vmul.f32 %v853, %v880
        %v883 = vrot.slane %v465, 1
        %v884 = vlaneseq
        %v885 = vshrl.u32 %v884, 7
        %v886 = vsub.s32 0, %v885
        %v887 = vrot.slane %v883, %v886
        %v889 = vmul.f32 %v887, %v881
        %v890 = vmul.f32 %v887, %v882
        %891 = vrot.lane.b32.xlu0 %v465, 64
        %v892 = vpop.permute.xlu0 %891
        %v893 = vrot.slane %v892, 1
        %v894 = vlaneseq
        %v895 = vshrl.u32 %v894, 7
        %v896 = vsub.s32 0, %v895
        %v897 = vrot.slane %v893, %v896
        %v899 = vadd.f32 %v889, %v897
        %v900 = vadd.f32 %v890, %v897
        %v901 = vadd.f32 %v899, %v852
        %v902 = vadd.f32 %v900, %v853
        %v903 = vpack.c.bf16 %v902, %v901
        %v904 = vld [vmem:[%s391] sm:$0xf]
        %v905 = vld [vmem:[%s391 + $0x4] sm:$0xf]
        %v906 = vld [vmem:[%s391 + $0x8] sm:$0xf]
        %v907 = vld [vmem:[%s391 + $0xc] sm:$0xf]
        %v908 = vld [vmem:[%s391 + $0x10] sm:$0xf]
        %v909 = vld [vmem:[%s391 + $0x14] sm:$0xf]
        %v910 = vld [vmem:[%s391 + $0x18] sm:$0xf]
        %v911 = vld [vmem:[%s391 + $0x1c] sm:$0xf]
        %v920 = vunpack.c.l.b16 %v904
        %v921 = vunpack.c.l.b16 %v905
        %v922 = vunpack.c.l.b16 %v906
        %v923 = vunpack.c.l.b16 %v907
        %v924 = vunpack.c.l.b16 %v908
        %v925 = vunpack.c.l.b16 %v909
        %v926 = vunpack.c.l.b16 %v910
        %v927 = vunpack.c.l.b16 %v911
        %v928 = vpack.c.b16 %v921, %v920
        %v929 = vpack.c.b16 %v923, %v922
        %v930 = vpack.c.b16 %v925, %v924
        %v931 = vpack.c.b16 %v927, %v926
        %936 = vrot.lane.b32.xlu0 %v559, 96
        %v937 = vpop.permute.xlu0 %936
        %v940 = vsel %vm856, %v903, 0
        %942 = vmatprep.subr.bf16.mxu0 0
        %943 = vmatpush1.bf16.msra.mxu0 %v928
        %944 = vmatprep.subr.bf16.mxu0 0
        %945 = vmatpush1.bf16.msra.mxu0 %v929
        %946 = vmatprep.subr.bf16.mxu0 0
        %947 = vmatpush1.bf16.msra.mxu0 %v930
        %948 = vmatprep.subr.bf16.mxu0 0
        %949 = vmatpush1.bf16.msra.mxu0 %v931
        %950 = vmatprep.subr.bf16.mxu0 0
        %951 = vmatpush1.bf16.msra.mxu0 0
        %952 = vmatprep.subr.bf16.mxu0 0
        %953 = vmatpush1.bf16.msra.mxu0 0
        %954 = vmatprep.subr.bf16.mxu0 0
        %955 = vmatpush1.bf16.msra.mxu0 0
        %956 = vmatprep.subr.bf16.mxu0 0
        %957 = vmatpush1.bf16.msra.mxu0 0
        %958 = vmatprep.subr.bf16.mxu0 0
        %959 = vmatpush1.bf16.msra.mxu0 0
        %960 = vmatprep.subr.bf16.mxu0 0
        %961 = vmatpush1.bf16.msra.mxu0 0
        %962 = vmatprep.subr.bf16.mxu0 0
        %963 = vmatpush1.bf16.msra.mxu0 0
        %964 = vmatprep.subr.bf16.mxu0 0
        %965 = vmatpush1.bf16.msra.mxu0 0
        %966 = vmatprep.subr.bf16.mxu0 0
        %967 = vmatpush1.bf16.msra.mxu0 0
        %968 = vmatprep.subr.bf16.mxu0 0
        %969 = vmatpush1.bf16.msra.mxu0 0
        %970 = vmatprep.subr.bf16.mxu0 0
        %971 = vmatpush1.bf16.msra.mxu0 0
        %972 = vmatprep.subr.bf16.mxu0 0
        %973 = vmatpush1.bf16.msra.mxu0 0
        %974 = vmatprep.mubr.bf16.mxu0 0
        %975 = vmatmul.mubr.bf16.gmra.mrb[0].mxu0 %v940
        %v976 = vpop.f32.mrb[0].mxu0
        %v977 = vadd.f32 %v937, %v976
        %v978 = vpop.f32.mrb[0].mxu0
        %v979 = vpop.f32.mrb[0].mxu0
        %v980 = vadd.f32 %v937, %v979
        %v981 = vpop.f32.mrb[0].mxu0
        %982 = vdwg.mxu0
        %v983 = vadd.f32 %v467, %v977
        %v984 = vadd.f32 %v468, %v980
        %p985 = scmp.lt.s32.totalorder %s27, 1
        // Predicated region
        $region57: #{tpu_custom_call.1} parent=51 // pred_check
          %p986 = pneg %p985
        $region58: #{tpu_custom_call.1} parent=51 // pred_check_branch
          %988 = sbr.rel (%p986) target = $region60
        $region59: #{tpu_custom_call.1} parent=51 // pred_region
          %989 = vst.msk [vmem:[#allocation2] sm:$0xff] %vm757, %v983
          %990 = vst.msk [vmem:[#allocation2 + $0x8] sm:$0xff] %vm757, %v984
        $region60: #{tpu_custom_call.1} parent=51 // pred_fallthru
          _
        %p991 = scmp.eq.s32.totalorder %s27, 1
        // Predicated region
        $region61: #{tpu_custom_call.1} parent=51 // pred_check
          %p992 = pneg %p991
        $region62: #{tpu_custom_call.1} parent=51 // pred_check_branch
          %994 = sbr.rel (%p992) target = $region64
        $region63: #{tpu_custom_call.1} parent=51 // pred_region
          %v995 = vld [vmem:[%s2] sm:$0x1]
          %v996 = vld [vmem:[%s2] sm:$0x3]
          %v997 = vsel %vm757, %v983, 0.0
          %998 = vadd.xlane.f32.xlu0 %v997
          %v999 = vpop.xlane.xlu0 %998
          %v1000 = vsel %vm757, %v984, 0.0
          %1001 = vadd.xlane.f32.xlu0 %v1000
          %v1002 = vpop.xlane.xlu0 %1001
          %v1003 = vrcp.pop 32.0
          %v1004 = vmul.f32 %v999, %v1003
          %v1005 = vmul.f32 %v1002, %v1003
          %v1006 = vsub.f32 %v983, %v1004
          %v1007 = vsub.f32 %v984, %v1005
          %v1008 = vmul.f32 %v1006, %v1006
          %v1009 = vmul.f32 %v1007, %v1007
          %v1010 = vsel %vm757, %v1008, 0.0
          %1011 = vadd.xlane.f32.xlu0 %v1010
          %v1012 = vpop.xlane.xlu0 %1011
          %v1013 = vsel %vm757, %v1009, 0.0
          %1014 = vadd.xlane.f32.xlu0 %v1013
          %v1015 = vpop.xlane.xlu0 %1014
          %v1016 = vmul.f32 %v1012, %v1003
          %v1017 = vmul.f32 %v1015, %v1003
          %v1018 = vadd.f32 %v1016, 1e-06
          %v1019 = vadd.f32 %v1017, 1e-06
          %v1020 = vrsqrt.pop %v1018
          %v1021 = vrsqrt.pop %v1019
          %v1022 = vmul.f32 %v1006, %v1020
          %v1023 = vmul.f32 %v1007, %v1021
          %v1025 = vlaneseq
          %v1026 = vshrl.u32 %v1025, 7
          %v1027 = vsub.s32 0, %v1026
          %v1028 = vrot.slane %v995, %v1027
          %1029 = vrot.lane.b32.xlu0 %v1028, 96
          %v1030 = vpop.permute.xlu0 %1029
          %v1032 = vmul.f32 %v1022, %v1030
          %v1033 = vmul.f32 %v1023, %v1030
          %1034 = vrot.lane.b32.xlu0 %v1028, 64
          %v1035 = vpop.permute.xlu0 %1034
          %v1037 = vadd.f32 %v1032, %v1035
          %v1038 = vadd.f32 %v1033, %v1035
          %v1039 = vpack.c.bf16 %v1038, %v1037
          %v1040 = vld [vmem:[%s7] sm:$0xf]
          %v1041 = vld [vmem:[%s7 + $0x4] sm:$0xf]
          %v1042 = vld [vmem:[%s7 + $0x8] sm:$0xf]
          %v1043 = vld [vmem:[%s7 + $0xc] sm:$0xf]
          %v1045 = vlaneseq
          %v1046 = vshrl.u32 %v1045, 7
          %v1047 = vsub.s32 0, %v1046
          %v1048 = vrot.slane %v996, %v1047
          %v1049 = vlaneseq
          %v1050 = vshrl.u32 %v1049, 7
          %v1051 = vsub.s32 1, %v1050
          %v1052 = vrot.slane %v996, %v1051
          %v1057 = vunpack.c.l.b16 %v1040
          %v1058 = vunpack.c.l.b16 %v1041
          %v1059 = vunpack.c.l.b16 %v1042
          %v1060 = vunpack.c.l.b16 %v1043
          %v1061 = vpack.c.b16 %v1058, %v1057
          %v1062 = vpack.c.b16 %v1060, %v1059
          %1065 = vrot.lane.b32.xlu0 %v1048, 32
          %v1066 = vpop.permute.xlu0 %1065
          %1067 = vrot.lane.b32.xlu0 %v1052, 32
          %v1068 = vpop.permute.xlu0 %1067
          %v1069 = vsel %vm757, %v1066, %v1068
          %v1072 = vsel %vm757, %v1039, 0
          %1074 = vmatprep.subr.bf16.mxu0 0
          %1075 = vmatpush1.bf16.msra.mxu0 %v1061
          %1076 = vmatprep.subr.bf16.mxu0 0
          %1077 = vmatpush1.bf16.msra.mxu0 %v1062
          %1078 = vmatprep.subr.bf16.mxu0 0
          %1079 = vmatpush1.bf16.msra.mxu0 0
          %1080 = vmatprep.subr.bf16.mxu0 0
          %1081 = vmatpush1.bf16.msra.mxu0 0
          %1082 = vmatprep.subr.bf16.mxu0 0
          %1083 = vmatpush1.bf16.msra.mxu0 0
          %1084 = vmatprep.subr.bf16.mxu0 0
          %1085 = vmatpush1.bf16.msra.mxu0 0
          %1086 = vmatprep.subr.bf16.mxu0 0
          %1087 = vmatpush1.bf16.msra.mxu0 0
          %1088 = vmatprep.subr.bf16.mxu0 0
          %1089 = vmatpush1.bf16.msra.mxu0 0
          %1090 = vmatprep.subr.bf16.mxu0 0
          %1091 = vmatpush1.bf16.msra.mxu0 0
          %1092 = vmatprep.subr.bf16.mxu0 0
          %1093 = vmatpush1.bf16.msra.mxu0 0
          %1094 = vmatprep.subr.bf16.mxu0 0
          %1095 = vmatpush1.bf16.msra.mxu0 0
          %1096 = vmatprep.subr.bf16.mxu0 0
          %1097 = vmatpush1.bf16.msra.mxu0 0
          %1098 = vmatprep.subr.bf16.mxu0 0
          %1099 = vmatpush1.bf16.msra.mxu0 0
          %1100 = vmatprep.subr.bf16.mxu0 0
          %1101 = vmatpush1.bf16.msra.mxu0 0
          %1102 = vmatprep.subr.bf16.mxu0 0
          %1103 = vmatpush1.bf16.msra.mxu0 0
          %1104 = vmatprep.subr.bf16.mxu0 0
          %1105 = vmatpush1.bf16.msra.mxu0 0
          %1106 = vmatprep.mubr.bf16.mxu0 0
          %1107 = vmatmul.mubr.bf16.gmra.mrb[0].mxu0 %v1072
          %v1108 = vpop.f32.mrb[0].mxu0
          %v1109 = vadd.f32 %v1069, %v1108
          %v1110 = vpop.f32.mrb[0].mxu0
          %v1111 = vpop.f32.mrb[0].mxu0
          %v1112 = vadd.f32 %v1069, %v1111
          %v1113 = vpop.f32.mrb[0].mxu0
          %1114 = vdwg.mxu0
          %v1115 = vpack.c.bf16 %v1112, %v1109
          %v1117 = vunpack.c.l.b16 %v1115
          %v1118 = vunpack.c.h.b16 %v1115
          %v1119 = vpack.c.b16 %v1117, %v1117
          %v1120 = vpack.c.b16 %v1118, %v1118
          %1123 = vst [vmem:[%s367] sm:$0xf] %v1119
          %1124 = vst [vmem:[%s367 + $0x4] sm:$0xf] %v1120
        $region64: #{tpu_custom_call.1} parent=51 // pred_fallthru
          _
        %s1125 = sand.u32 %s235, 1
        %s1126 = scalar_lea.sflag [#allocation4], %s1125
        %s1127 = sand.u32 %s235, 1
        %s1128 = smul.addr %s1127, 8
        %s1129 = scalar_lea.vmem [#allocation3], %s1128
        // Predicated region
        $region65: #{tpu_custom_call.1} parent=51 // pred_check
          %p1130 = pneg %p245
        $region66: #{tpu_custom_call.1} parent=51 // pred_check_branch
          %1132 = sbr.rel (%p1130) target = $region68
        $region67: #{tpu_custom_call.1} parent=51 // pred_region
          %s1133 = smul.u32 2, %s26
          %s1135 = ssub.s32 128, 128
          %1136 = vsyncadd %s1126, %s1135
          %s1137 = smul.addr %s1133, 64
          %s1138 = scalar_lea.hbm %s8, %s1137
          %s1139 = sshll.u32 %s1129, 4
          %s1140 = int_to_ptr.vmem [resolvable:$true] %s1139
          %1145 = dma.vmem_to_hbm [thread:$0]  %s1140, 128, %s1138, %s1126, 64, 64, 4
        $region68: #{tpu_custom_call.1} parent=51 // pred_fallthru
          _
      $region52: #{tpu_custom_call.1} parent=5 // pred_fallthru
        _
      %p1146 = scmp.le.s32.totalorder 2, %s17
      // Predicated region
      $region69: #{tpu_custom_call.1} parent=5 // pred_check
        %p1147 = pneg %p1146
      $region70: #{tpu_custom_call.1} parent=5 // pred_check_branch
        %1149 = sbr.rel (%p1147) target = $region72
      $region71: #{tpu_custom_call.1} parent=5 // pred_region
        %s1150 = ssub.s32 %s17, 2
        // Predicated region
        $region73: #{tpu_custom_call.1} parent=71 // pred_check
          %p1151 = pneg %p251
        $region74: #{tpu_custom_call.1} parent=71 // pred_check_branch
          %1153 = sbr.rel (%p1151) target = $region76
        $region75: #{tpu_custom_call.1} parent=71 // pred_region
          %s1154 = sand.u32 %s236, 1
          %s1155 = scalar_lea.sflag [#allocation4], %s1154
          %s1156 = sand.u32 %s236, 1
          %s1157 = smul.addr %s1156, 8
          %s1158 = scalar_lea.vmem [#allocation3], %s1157
          %1159 = dma.done %s1155, 128
        $region76: #{tpu_custom_call.1} parent=71 // pred_fallthru
          _
      $region72: #{tpu_custom_call.1} parent=5 // pred_fallthru
        _
    $region6: #{tpu_custom_call.1} parent=1 // loop_footer
      %s21 = sadd.s32 1, %s17
    $region7: #{tpu_custom_call.1} parent=1 // loop_footer_branch
      %16 = sbr.rel target = $region3
    $region8: #{tpu_custom_call.1} parent=1 // loop_exit
      _
    %1160 = vsyncpa [#allocation4], 1
    %s1161 = scalar_lea.sflag [#allocation4], 1
    %1162 = vsyncpa %s1161, 1

</llo_original>
